<compile_context>
chip_gen: v5e
topology: v5e:2x2
jax: 0.10.0
libtpu: 0.0.40
codegen_flags: <defaults>
</compile_context>

<pallas_src>
import functools

import jax
import jax.numpy as jnp
from jax import lax
from jax.experimental import pallas as pl
from jax.experimental.pallas import tpu as pltpu


# ----------------------------------------------------------------------------
# small helpers (static tiling decisions, all trace-time Python)
# ----------------------------------------------------------------------------
def _pick_row_tile(m, candidates=(512, 256, 128, 64, 32, 16, 8)):
    for t in candidates:
        if t <= m and m % t == 0:
            return t
    return m


def _largest_divisor_leq(n, cap):
    cap = max(1, min(n, cap))
    for d in range(cap, 0, -1):
        if n % d == 0:
            return d
    return 1


# ----------------------------------------------------------------------------
# Pallas kernel 1: 1x1 conv == row-tiled matmul + bias (optional fused residual)
#   (x [+ residual]) @ w:(Cin,Cout) + b
# ----------------------------------------------------------------------------
def _linear_kernel(x_ref, w_ref, b_ref, o_ref):
    o_ref[...] = (
        jnp.dot(x_ref[...], w_ref[...], preferred_element_type=jnp.float32)
        + b_ref[...]
    ).astype(o_ref.dtype)


def _linear_residual_kernel(x_ref, r_ref, w_ref, b_ref, o_ref):
    xr = x_ref[...] + r_ref[...]
    o_ref[...] = (
        jnp.dot(xr, w_ref[...], preferred_element_type=jnp.float32) + b_ref[...]
    ).astype(o_ref.dtype)


def conv1x1_pallas(x_flat, w, b, residual=None):
    M, Cin = x_flat.shape
    Cout = w.shape[1]
    tm = _pick_row_tile(M)
    row_spec = pl.BlockSpec((tm, Cin), lambda i: (i, 0))
    w_spec = pl.BlockSpec((Cin, Cout), lambda i: (0, 0))   # stays resident in VMEM
    b_spec = pl.BlockSpec((1, Cout), lambda i: (0, 0))
    out_spec = pl.BlockSpec((tm, Cout), lambda i: (i, 0))
    common = dict(
        out_shape=jax.ShapeDtypeStruct((M, Cout), jnp.float32),
        grid=(M // tm,),
        out_specs=out_spec,
        compiler_params=pltpu.CompilerParams(dimension_semantics=("parallel",)),
    )
    if residual is None:
        return pl.pallas_call(
            _linear_kernel, in_specs=[row_spec, w_spec, b_spec], **common
        )(x_flat, w, b.reshape(1, Cout))
    return pl.pallas_call(
        _linear_residual_kernel,
        in_specs=[row_spec, row_spec, w_spec, b_spec],
        **common,
    )(x_flat, residual, w, b.reshape(1, Cout))


# ----------------------------------------------------------------------------
# Pallas kernel 2: depthwise 3x3 conv ("lepe"), NHWC.
#   One zero-padded copy in HBM; the 9 taps are shifted slices of the in-VMEM tile.
# ----------------------------------------------------------------------------
def _lepe_kernel(xp_ref, w_ref, b_ref, o_ref):
    H, W, _ = o_ref.shape
    xp = xp_ref[...]                                  # (H+2, W+2, C), one VMEM load
    acc = xp[0:H, 0:W, :] * w_ref[0]
    for i in range(1, 9):
        dy, dx = divmod(i, 3)
        acc = acc + xp[dy:dy + H, dx:dx + W, :] * w_ref[i]
    o_ref[...] = (acc + b_ref[...]).astype(o_ref.dtype)


def lepe_pallas(v_nhwc, w_taps, b):
    N, H, W, C = v_nhwc.shape
    v_pad = jnp.pad(v_nhwc, ((0, 0), (1, 1), (1, 1), (0, 0)))
    Hp, Wp = H + 2, W + 2
    # TODO(synk): for very large H*W*C, tile over rows with manual halo DMA instead of
    # loading a whole (H+2, W+2, C) image per grid step.
    return pl.pallas_call(
        _lepe_kernel,
        out_shape=jax.ShapeDtypeStruct((N, H, W, C), jnp.float32),
        grid=(N,),
        in_specs=[
            pl.BlockSpec((None, Hp, Wp, C), lambda n: (n, 0, 0, 0)),
            pl.BlockSpec((9, 1, C), lambda n: (0, 0, 0)),
            pl.BlockSpec((1, C), lambda n: (0, 0)),
        ],
        out_specs=pl.BlockSpec((None, H, W, C), lambda n: (n, 0, 0, 0)),
        compiler_params=pltpu.CompilerParams(dimension_semantics=("parallel",)),
    )(v_pad, w_taps, b.reshape(1, C))


# ----------------------------------------------------------------------------
# Pallas kernel 3: regional routing attention.
#   q:       (R, reg_pix, hd)              R = batch * heads * n_regions
#   k, v:    (R, kv_len, hd)               kv_len = topk * kv_pix (pre-gathered, bf16)
#   One full softmax per region; several regions batched per grid step.
# ----------------------------------------------------------------------------
def _make_attn_kernel(scale):
    def kernel(q_ref, k_ref, v_ref, o_ref):
        q = q_ref[...]                                        # (rb, reg_pix, hd) bf16
        k = k_ref[...]                                        # (rb, kv_len, hd)  bf16
        v = v_ref[...]
        # s[b, i, j] = sum_d q[b, i, d] * k[b, j, d]   (batched, no explicit k.T)
        s = lax.dot_general(
            q, k, dimension_numbers=(((2,), (2,)), ((0,), (0,))),
            preferred_element_type=jnp.float32) * scale        # f32 scores
        m = jnp.max(s, axis=-1, keepdims=True)
        p = jnp.exp(s - m)
        l = jnp.sum(p, axis=-1, keepdims=True)
        o = lax.dot_general(
            p.astype(v.dtype), v,
            dimension_numbers=(((2,), (1,)), ((0,), (0,))),
            preferred_element_type=jnp.float32)                # (rb, reg_pix, hd) f32
        o_ref[...] = (o * pl.reciprocal(l, approx=True)).astype(o_ref.dtype)

    return kernel


def regional_routing_attention_pallas(q, k, v, scale, *, vmem_budget=8 << 20):
    R, reg_pix, hd = q.shape
    kv_len = k.shape[1]
    q16 = q if q.dtype == jnp.bfloat16 else q.astype(jnp.bfloat16)
    k16 = k if k.dtype == jnp.bfloat16 else k.astype(jnp.bfloat16)
    v16 = v if v.dtype == jnp.bfloat16 else v.astype(jnp.bfloat16)

    # Double-buffering-aware per-region VMEM footprint:
    #   2x (q,k,v bf16 blocks) + 2x (f32 out block) + f32 score/prob temps.
    q_b = reg_pix * hd * 2
    kv_b = 2 * kv_len * hd * 2
    out_b = reg_pix * hd * 4
    s_b = reg_pix * kv_len * 4
    per_region = 2 * (q_b + kv_b + out_b) + 2 * s_b
    rb = _largest_divisor_leq(R, vmem_budget // max(per_region, 1))

    return pl.pallas_call(
        _make_attn_kernel(scale),
        out_shape=jax.ShapeDtypeStruct((R, reg_pix, hd), jnp.float32),
        grid=(R // rb,),
        in_specs=[
            pl.BlockSpec((rb, reg_pix, hd), lambda i: (i, 0, 0)),
            pl.BlockSpec((rb, kv_len, hd), lambda i: (i, 0, 0)),
            pl.BlockSpec((rb, kv_len, hd), lambda i: (i, 0, 0)),
        ],
        out_specs=pl.BlockSpec((rb, reg_pix, hd), lambda i: (i, 0, 0)),
        compiler_params=pltpu.CompilerParams(dimension_semantics=("parallel",)),
    )(q16, k16, v16)


# ----------------------------------------------------------------------------
# Glue: channels-last grid<->sequence rearranges (pure layout, kept in JAX)
# ----------------------------------------------------------------------------
def _grid2seq_nhwc(x_nhwc, region_size, num_heads):
    N, H, W, C = x_nhwc.shape
    rh, rw = H // region_size[0], W // region_size[1]
    hd = C // num_heads
    x = x_nhwc.reshape(N, rh, region_size[0], rw, region_size[1], num_heads, hd)
    x = jnp.transpose(x, (0, 5, 1, 3, 2, 4, 6))        # (N, heads, rh, rw, p, q, hd)
    x = x.reshape(N, num_heads, rh * rw, region_size[0] * region_size[1], hd)
    return x, rh, rw


def _seq2grid_nhwc(x, region_h, region_w, region_size):
    N, nh, _, _, hd = x.shape
    x = x.reshape(N, nh, region_h, region_w, region_size[0], region_size[1], hd)
    x = jnp.transpose(x, (0, 2, 4, 3, 5, 1, 6))        # (N, rh, p, rw, q, heads, hd)
    return x.reshape(N, region_h * region_size[0], region_w * region_size[1], nh * hd)


# ----------------------------------------------------------------------------
# Full module forward (NCHW in / NCHW out, NHWC everywhere in between)
# ----------------------------------------------------------------------------
def bilevel_routing_attention_nchw(x, params, *, num_heads, n_win, topk):
    N, C, H, W = x.shape
    assert C % num_heads == 0
    # TODO(synk): auto_pad path (inputs whose H/W are not divisible by n_win).
    assert H % n_win == 0 and W % n_win == 0
    rsz_h, rsz_w = H // n_win, W // n_win
    region_size = (rsz_h, rsz_w)
    reg_pix = rsz_h * rsz_w
    nreg = n_win * n_win
    hd = C // num_heads
    scale = float(C) ** (-0.5)
    M = N * H * W

    # --- single NCHW -> NHWC transpose at the module boundary ---
    x_flat = jnp.transpose(x, (0, 2, 3, 1)).reshape(M, C)

    # --- qkv 1x1 conv (tiled Pallas matmul) ---
    qkv = conv1x1_pallas(x_flat, params["w_qkv"], params["b_qkv"])      # (M, 3C) f32
    q_f, k_f, v_f = jnp.split(qkv, 3, axis=1)
    q_nhwc = q_f.reshape(N, H, W, C)
    k_nhwc = k_f.reshape(N, H, W, C)
    v_nhwc = v_f.reshape(N, H, W, C)

    # --- region-level routing (tiny; mean-pool, matmul, top-k stay in XLA, f32) ---
    q_r = q_nhwc.reshape(N, n_win, rsz_h, n_win, rsz_w, C).mean(axis=(2, 4))
    k_r = k_nhwc.reshape(N, n_win, rsz_h, n_win, rsz_w, C).mean(axis=(2, 4))
    a_r = jnp.einsum('nrc,nsc->nrs',
                     q_r.reshape(N, nreg, C), k_r.reshape(N, nreg, C))
    _, idx_r = jax.lax.top_k(a_r, topk)                                 # (N, nreg, topk)

    # --- fine-grained attention: bf16 cast *before* the top-k K/V gather so the
    #     duplicated gathered tensors carry half the HBM traffic ---
    q_seq, qrh, qrw = _grid2seq_nhwc(q_nhwc.astype(jnp.bfloat16),
                                     region_size, num_heads)            # (N,nh,nreg,reg_pix,hd)
    k_seq, _, _ = _grid2seq_nhwc(k_nhwc.astype(jnp.bfloat16), region_size, num_heads)
    v_seq, _, _ = _grid2seq_nhwc(v_nhwc.astype(jnp.bfloat16), region_size, num_heads)

    gather_idx = jnp.broadcast_to(
        idx_r[:, None, :, :, None, None].astype(jnp.int32),
        (N, num_heads, nreg, topk, reg_pix, hd),
    ).reshape(N, num_heads, nreg * topk, reg_pix, hd)
    k_g = jnp.take_along_axis(k_seq, gather_idx, axis=2)                # (N,nh,nreg*topk,reg_pix,hd)
    v_g = jnp.take_along_axis(v_seq, gather_idx, axis=2)

    R = N * num_heads * nreg
    kv_len = topk * reg_pix
    out_seq = regional_routing_attention_pallas(
        q_seq.reshape(R, reg_pix, hd),
        k_g.reshape(R, kv_len, hd),
        v_g.reshape(R, kv_len, hd),
        scale)
    out_nhwc = _seq2grid_nhwc(out_seq.reshape(N, num_heads, nreg, reg_pix, hd),
                              qrh, qrw, region_size)                    # (N,H,W,C) f32

    # --- lepe depthwise 3x3 (Pallas); residual add fused into output conv ---
    lepe = lepe_pallas(v_nhwc, params["w_lepe"], params["b_lepe"])      # (N,H,W,C) f32
    y_flat = conv1x1_pallas(out_nhwc.reshape(M, C), params["w_out"],
                            params["b_out"], residual=lepe.reshape(M, C))

    # --- single NHWC -> NCHW transpose at the module boundary ---
    return jnp.transpose(y_flat.reshape(N, H, W, C), (0, 3, 1, 2))


# ----------------------------------------------------------------------------
# Deterministic parameter construction (synthetic init, no checkpoint)
# ----------------------------------------------------------------------------
def make_params(key, dim):
    ks = jax.random.split(key, 6)
    return {
        # qkv_linear: Conv2d(dim, 3*dim, 1) -> matmul weight (dim, 3*dim)
        "w_qkv": 0.1 * jax.random.normal(ks[0], (dim, 3 * dim), jnp.float32),
        "b_qkv": 0.1 * jax.random.normal(ks[1], (3 * dim,), jnp.float32),
        # output_linear: Conv2d(dim, dim, 1)
        "w_out": 0.1 * jax.random.normal(ks[2], (dim, dim), jnp.float32),
        "b_out": 0.1 * jax.random.normal(ks[3], (dim,), jnp.float32),
        # lepe: depthwise Conv2d(dim, dim, 3, groups=dim) -> (9, 1, dim) taps
        # (torch weight w[c, 0, dy, dx] maps to w_lepe[dy*3+dx, 0, c])
        "w_lepe": 0.1 * jax.random.normal(ks[4], (9, 1, dim), jnp.float32),
        "b_lepe": 0.1 * jax.random.normal(ks[5], (dim,), jnp.float32),
    }


if __name__ == "__main__":
    # Small configuration consistent with the module:
    # dim=8, num_heads=2, n_win=2, topk=2, side_dwconv=3, input (2, 8, 8, 8)
    N, dim, H, W = 2, 8, 8, 8
    num_heads, n_win, topk = 2, 2, 2

    key = jax.random.PRNGKey(0)
    k_x, k_p = jax.random.split(key)
    x = jax.random.normal(k_x, (N, dim, H, W), jnp.float32)
    params = make_params(k_p, dim)

    fwd = jax.jit(functools.partial(bilevel_routing_attention_nchw,
                                    num_heads=num_heads, n_win=n_win, topk=topk))
    y = fwd(x, params)
    y = jax.block_until_ready(y)

    assert y.shape == (N, dim, H, W), y.shape
    assert bool(jnp.all(jnp.isfinite(y)))
    print("KERNEL_OK")
</pallas_src>

<mosaic_0001>
module attributes {stable_mosaic.version = 11 : i64} {
  func.func @_linear_kernel(%arg0: i32, %arg1: memref<128x8xf32, #tpu.memory_space<vmem>>, %arg2: memref<8x24xf32, #tpu.memory_space<vmem>>, %arg3: memref<1x24xf32, #tpu.memory_space<vmem>>, %arg4: memref<128x24xf32, #tpu.memory_space<vmem>>) attributes {dimension_semantics = [#tpu.dimension_semantics<parallel>], iteration_bounds = array<i64: 1>, scalar_prefetch = 0 : i64, scratch_operands = 0 : i64, tpu.core_type = #tpu.core_type<tc>, window_params = [{transform_indices = @transform_0, window_bounds = array<i64: 128, 8>}, {pipeline_mode = #tpu.pipeline_mode<synchronous>, transform_indices = @transform_1, window_bounds = array<i64: 8, 24>}, {pipeline_mode = #tpu.pipeline_mode<synchronous>, transform_indices = @transform_2, window_bounds = array<i64: 1, 24>}, {transform_indices = @transform_3, window_bounds = array<i64: 128, 24>}]} {
    %c0 = arith.constant 0 : index
    %c0_0 = arith.constant 0 : index
    %0 = vector.load %arg1[%c0, %c0_0] : memref<128x8xf32, #tpu.memory_space<vmem>>, vector<128x8xf32>
    %c0_1 = arith.constant 0 : index
    %c0_2 = arith.constant 0 : index
    %1 = vector.load %arg2[%c0_1, %c0_2] : memref<8x24xf32, #tpu.memory_space<vmem>>, vector<8x24xf32>
    %cst = arith.constant dense<0.000000e+00> : vector<128x24xf32>
    %2 = tpu.matmul %0, %1, %cst {dimension_numbers = #tpu.dot_dimension_numbers<[1], [0], [0], [1], [0, 0, 1, 1], [], []>} : vector<128x8xf32>, vector<8x24xf32>, vector<128x24xf32> -> vector<128x24xf32>
    %c0_3 = arith.constant 0 : index
    %c0_4 = arith.constant 0 : index
    %3 = vector.load %arg3[%c0_3, %c0_4] : memref<1x24xf32, #tpu.memory_space<vmem>>, vector<1x24xf32>
    %4 = vector.broadcast %3 : vector<1x24xf32> to vector<128x24xf32>
    %5 = arith.addf %2, %4 : vector<128x24xf32>
    %c0_5 = arith.constant 0 : index
    %c0_6 = arith.constant 0 : index
    %6 = vector.load %arg4[%c0_5, %c0_6] : memref<128x24xf32, #tpu.memory_space<vmem>>, vector<128x24xf32>
    tpu.vector_store %arg4[%c0_5, %c0_6], %5 {strides = array<i32>} : memref<128x24xf32, #tpu.memory_space<vmem>>, vector<128x24xf32>,
    return
  }
  func.func @transform_0(%arg0: i32) -> (i32, i32) {
    %c0_i32 = arith.constant 0 : i32
    %c0_i32_0 = arith.constant 0 : i32
    return %arg0, %c0_i32 : i32, i32
  }
  func.func @transform_1(%arg0: i32) -> (i32, i32) {
    %c0_i32 = arith.constant 0 : i32
    %c0_i32_0 = arith.constant 0 : i32
    %c0_i32_1 = arith.constant 0 : i32
    return %c0_i32, %c0_i32_0 : i32, i32
  }
  func.func @transform_2(%arg0: i32) -> (i32, i32) {
    %c0_i32 = arith.constant 0 : i32
    %c0_i32_0 = arith.constant 0 : i32
    %c0_i32_1 = arith.constant 0 : i32
    return %c0_i32, %c0_i32_0 : i32, i32
  }
  func.func @transform_3(%arg0: i32) -> (i32, i32) {
    %c0_i32 = arith.constant 0 : i32
    %c0_i32_0 = arith.constant 0 : i32
    return %arg0, %c0_i32 : i32, i32
  }
}

module attributes {stable_mosaic.version = 11 : i64} {
  func.func @_lepe_kernel(%arg0: i32, %arg1: memref<1x10x10x8xf32, #tpu.memory_space<vmem>>, %arg2: memref<9x1x8xf32, #tpu.memory_space<vmem>>, %arg3: memref<1x8xf32, #tpu.memory_space<vmem>>, %arg4: memref<1x8x8x8xf32, #tpu.memory_space<vmem>>) attributes {dimension_semantics = [#tpu.dimension_semantics<parallel>], iteration_bounds = array<i64: 2>, scalar_prefetch = 0 : i64, scratch_operands = 0 : i64, tpu.core_type = #tpu.core_type<tc>, window_params = [{transform_indices = @transform_0, window_bounds = array<i64: 1, 10, 10, 8>}, {pipeline_mode = #tpu.pipeline_mode<synchronous>, transform_indices = @transform_1, window_bounds = array<i64: 9, 1, 8>}, {pipeline_mode = #tpu.pipeline_mode<synchronous>, transform_indices = @transform_2, window_bounds = array<i64: 1, 8>}, {transform_indices = @transform_3, window_bounds = array<i64: 1, 8, 8, 8>}]} {
    %c0 = arith.constant 0 : index
    %c0_0 = arith.constant 0 : index
    %c0_1 = arith.constant 0 : index
    %c0_2 = arith.constant 0 : index
    %0 = vector.load %arg1[%c0, %c0_0, %c0_1, %c0_2] : memref<1x10x10x8xf32, #tpu.memory_space<vmem>>, vector<1x10x10x8xf32>
    %1 = vector.shape_cast %0 : vector<1x10x10x8xf32> to vector<10x10x8xf32>
    %2 = vector.extract_strided_slice %1 {offsets = [0, 0, 0], sizes = [8, 8, 8], strides = [1, 1, 1]} : vector<10x10x8xf32> to vector<8x8x8xf32>
    %c0_3 = arith.constant 0 : index
    %c0_4 = arith.constant 0 : index
    %c0_5 = arith.constant 0 : index
    %3 = vector.load %arg2[%c0_3, %c0_4, %c0_5] : memref<9x1x8xf32, #tpu.memory_space<vmem>>, vector<1x1x8xf32>
    %4 = vector.shape_cast %3 : vector<1x1x8xf32> to vector<1x8xf32>
    %5 = vector.shape_cast %4 : vector<1x8xf32> to vector<1x1x8xf32>
    %6 = vector.broadcast %5 : vector<1x1x8xf32> to vector<8x8x8xf32>
    %7 = arith.mulf %2, %6 : vector<8x8x8xf32>
    %8 = vector.extract_strided_slice %1 {offsets = [0, 1, 0], sizes = [8, 8, 8], strides = [1, 1, 1]} : vector<10x10x8xf32> to vector<8x8x8xf32>
    %c1 = arith.constant 1 : index
    %c0_6 = arith.constant 0 : index
    %c0_7 = arith.constant 0 : index
    %9 = vector.load %arg2[%c1, %c0_6, %c0_7] : memref<9x1x8xf32, #tpu.memory_space<vmem>>, vector<1x1x8xf32>
    %10 = vector.shape_cast %9 : vector<1x1x8xf32> to vector<1x8xf32>
    %11 = vector.shape_cast %10 : vector<1x8xf32> to vector<1x1x8xf32>
    %12 = vector.broadcast %11 : vector<1x1x8xf32> to vector<8x8x8xf32>
    %13 = arith.mulf %8, %12 : vector<8x8x8xf32>
    %14 = arith.addf %7, %13 : vector<8x8x8xf32>
    %15 = vector.extract_strided_slice %1 {offsets = [0, 2, 0], sizes = [8, 8, 8], strides = [1, 1, 1]} : vector<10x10x8xf32> to vector<8x8x8xf32>
    %c2 = arith.constant 2 : index
    %c0_8 = arith.constant 0 : index
    %c0_9 = arith.constant 0 : index
    %16 = vector.load %arg2[%c2, %c0_8, %c0_9] : memref<9x1x8xf32, #tpu.memory_space<vmem>>, vector<1x1x8xf32>
    %17 = vector.shape_cast %16 : vector<1x1x8xf32> to vector<1x8xf32>
    %18 = vector.shape_cast %17 : vector<1x8xf32> to vector<1x1x8xf32>
    %19 = vector.broadcast %18 : vector<1x1x8xf32> to vector<8x8x8xf32>
    %20 = arith.mulf %15, %19 : vector<8x8x8xf32>
    %21 = arith.addf %14, %20 : vector<8x8x8xf32>
    %22 = vector.extract_strided_slice %1 {offsets = [1, 0, 0], sizes = [8, 8, 8], strides = [1, 1, 1]} : vector<10x10x8xf32> to vector<8x8x8xf32>
    %c3 = arith.constant 3 : index
    %c0_10 = arith.constant 0 : index
    %c0_11 = arith.constant 0 : index
    %23 = vector.load %arg2[%c3, %c0_10, %c0_11] : memref<9x1x8xf32, #tpu.memory_space<vmem>>, vector<1x1x8xf32>
    %24 = vector.shape_cast %23 : vector<1x1x8xf32> to vector<1x8xf32>
    %25 = vector.shape_cast %24 : vector<1x8xf32> to vector<1x1x8xf32>
    %26 = vector.broadcast %25 : vector<1x1x8xf32> to vector<8x8x8xf32>
    %27 = arith.mulf %22, %26 : vector<8x8x8xf32>
    %28 = arith.addf %21, %27 : vector<8x8x8xf32>
    %29 = vector.extract_strided_slice %1 {offsets = [1, 1, 0], sizes = [8, 8, 8], strides = [1, 1, 1]} : vector<10x10x8xf32> to vector<8x8x8xf32>
    %c4 = arith.constant 4 : index
    %c0_12 = arith.constant 0 : index
    %c0_13 = arith.constant 0 : index
    %30 = vector.load %arg2[%c4, %c0_12, %c0_13] : memref<9x1x8xf32, #tpu.memory_space<vmem>>, vector<1x1x8xf32>
    %31 = vector.shape_cast %30 : vector<1x1x8xf32> to vector<1x8xf32>
    %32 = vector.shape_cast %31 : vector<1x8xf32> to vector<1x1x8xf32>
    %33 = vector.broadcast %32 : vector<1x1x8xf32> to vector<8x8x8xf32>
    %34 = arith.mulf %29, %33 : vector<8x8x8xf32>
    %35 = arith.addf %28, %34 : vector<8x8x8xf32>
    %36 = vector.extract_strided_slice %1 {offsets = [1, 2, 0], sizes = [8, 8, 8], strides = [1, 1, 1]} : vector<10x10x8xf32> to vector<8x8x8xf32>
    %c5 = arith.constant 5 : index
    %c0_14 = arith.constant 0 : index
    %c0_15 = arith.constant 0 : index
    %37 = vector.load %arg2[%c5, %c0_14, %c0_15] : memref<9x1x8xf32, #tpu.memory_space<vmem>>, vector<1x1x8xf32>
    %38 = vector.shape_cast %37 : vector<1x1x8xf32> to vector<1x8xf32>
    %39 = vector.shape_cast %38 : vector<1x8xf32> to vector<1x1x8xf32>
    %40 = vector.broadcast %39 : vector<1x1x8xf32> to vector<8x8x8xf32>
    %41 = arith.mulf %36, %40 : vector<8x8x8xf32>
    %42 = arith.addf %35, %41 : vector<8x8x8xf32>
    %43 = vector.extract_strided_slice %1 {offsets = [2, 0, 0], sizes = [8, 8, 8], strides = [1, 1, 1]} : vector<10x10x8xf32> to vector<8x8x8xf32>
    %c6 = arith.constant 6 : index
    %c0_16 = arith.constant 0 : index
    %c0_17 = arith.constant 0 : index
    %44 = vector.load %arg2[%c6, %c0_16, %c0_17] : memref<9x1x8xf32, #tpu.memory_space<vmem>>, vector<1x1x8xf32>
    %45 = vector.shape_cast %44 : vector<1x1x8xf32> to vector<1x8xf32>
    %46 = vector.shape_cast %45 : vector<1x8xf32> to vector<1x1x8xf32>
    %47 = vector.broadcast %46 : vector<1x1x8xf32> to vector<8x8x8xf32>
    %48 = arith.mulf %43, %47 : vector<8x8x8xf32>
    %49 = arith.addf %42, %48 : vector<8x8x8xf32>
    %50 = vector.extract_strided_slice %1 {offsets = [2, 1, 0], sizes = [8, 8, 8], strides = [1, 1, 1]} : vector<10x10x8xf32> to vector<8x8x8xf32>
    %c7 = arith.constant 7 : index
    %c0_18 = arith.constant 0 : index
    %c0_19 = arith.constant 0 : index
    %51 = vector.load %arg2[%c7, %c0_18, %c0_19] : memref<9x1x8xf32, #tpu.memory_space<vmem>>, vector<1x1x8xf32>
    %52 = vector.shape_cast %51 : vector<1x1x8xf32> to vector<1x8xf32>
    %53 = vector.shape_cast %52 : vector<1x8xf32> to vector<1x1x8xf32>
    %54 = vector.broadcast %53 : vector<1x1x8xf32> to vector<8x8x8xf32>
    %55 = arith.mulf %50, %54 : vector<8x8x8xf32>
    %56 = arith.addf %49, %55 : vector<8x8x8xf32>
    %57 = vector.extract_strided_slice %1 {offsets = [2, 2, 0], sizes = [8, 8, 8], strides = [1, 1, 1]} : vector<10x10x8xf32> to vector<8x8x8xf32>
    %c8 = arith.constant 8 : index
    %c0_20 = arith.constant 0 : index
    %c0_21 = arith.constant 0 : index
    %58 = vector.load %arg2[%c8, %c0_20, %c0_21] : memref<9x1x8xf32, #tpu.memory_space<vmem>>, vector<1x1x8xf32>
    %59 = vector.shape_cast %58 : vector<1x1x8xf32> to vector<1x8xf32>
    %60 = vector.shape_cast %59 : vector<1x8xf32> to vector<1x1x8xf32>
    %61 = vector.broadcast %60 : vector<1x1x8xf32> to vector<8x8x8xf32>
    %62 = arith.mulf %57, %61 : vector<8x8x8xf32>
    %63 = arith.addf %56, %62 : vector<8x8x8xf32>
    %c0_22 = arith.constant 0 : index
    %c0_23 = arith.constant 0 : index
    %64 = vector.load %arg3[%c0_22, %c0_23] : memref<1x8xf32, #tpu.memory_space<vmem>>, vector<1x8xf32>
    %65 = vector.shape_cast %64 : vector<1x8xf32> to vector<1x1x8xf32>
    %66 = vector.broadcast %65 : vector<1x1x8xf32> to vector<8x8x8xf32>
    %67 = arith.addf %63, %66 : vector<8x8x8xf32>
    %c0_24 = arith.constant 0 : index
    %c0_25 = arith.constant 0 : index
    %c0_26 = arith.constant 0 : index
    %c0_27 = arith.constant 0 : index
    %68 = vector.load %arg4[%c0_24, %c0_25, %c0_26, %c0_27] : memref<1x8x8x8xf32, #tpu.memory_space<vmem>>, vector<1x8x8x8xf32>
    %69 = vector.shape_cast %68 : vector<1x8x8x8xf32> to vector<8x8x8xf32>
    %70 = vector.shape_cast %67 : vector<8x8x8xf32> to vector<1x8x8x8xf32>
    tpu.vector_store %arg4[%c0_24, %c0_25, %c0_26, %c0_27], %70 {strides = array<i32>} : memref<1x8x8x8xf32, #tpu.memory_space<vmem>>, vector<1x8x8x8xf32>,
    return
  }
  func.func @transform_0(%arg0: i32) -> (i32, i32, i32, i32) {
    %c0_i32 = arith.constant 0 : i32
    %c0_i32_0 = arith.constant 0 : i32
    %c0_i32_1 = arith.constant 0 : i32
    %c0_i32_2 = arith.constant 0 : i32
    return %arg0, %c0_i32, %c0_i32_0, %c0_i32_1 : i32, i32, i32, i32
  }
  func.func @transform_1(%arg0: i32) -> (i32, i32, i32) {
    %c0_i32 = arith.constant 0 : i32
    %c0_i32_0 = arith.constant 0 : i32
    %c0_i32_1 = arith.constant 0 : i32
    %c0_i32_2 = arith.constant 0 : i32
    return %c0_i32, %c0_i32_0, %c0_i32_1 : i32, i32, i32
  }
  func.func @transform_2(%arg0: i32) -> (i32, i32) {
    %c0_i32 = arith.constant 0 : i32
    %c0_i32_0 = arith.constant 0 : i32
    %c0_i32_1 = arith.constant 0 : i32
    return %c0_i32, %c0_i32_0 : i32, i32
  }
  func.func @transform_3(%arg0: i32) -> (i32, i32, i32, i32) {
    %c0_i32 = arith.constant 0 : i32
    %c0_i32_0 = arith.constant 0 : i32
    %c0_i32_1 = arith.constant 0 : i32
    %c0_i32_2 = arith.constant 0 : i32
    return %arg0, %c0_i32, %c0_i32_0, %c0_i32_1 : i32, i32, i32, i32
  }
}

module attributes {stable_mosaic.version = 11 : i64} {
  func.func @kernel(%arg0: i32, %arg1: memref<16x16x4xbf16, #tpu.memory_space<vmem>>, %arg2: memref<16x32x4xbf16, #tpu.memory_space<vmem>>, %arg3: memref<16x32x4xbf16, #tpu.memory_space<vmem>>, %arg4: memref<16x16x4xf32, #tpu.memory_space<vmem>>) attributes {dimension_semantics = [#tpu.dimension_semantics<parallel>], iteration_bounds = array<i64: 1>, scalar_prefetch = 0 : i64, scratch_operands = 0 : i64, tpu.core_type = #tpu.core_type<tc>, window_params = [{transform_indices = @transform_0, window_bounds = array<i64: 16, 16, 4>}, {transform_indices = @transform_1, window_bounds = array<i64: 16, 32, 4>}, {transform_indices = @transform_2, window_bounds = array<i64: 16, 32, 4>}, {transform_indices = @transform_3, window_bounds = array<i64: 16, 16, 4>}]} {
    %c0 = arith.constant 0 : index
    %c0_0 = arith.constant 0 : index
    %c0_1 = arith.constant 0 : index
    %0 = vector.load %arg1[%c0, %c0_0, %c0_1] : memref<16x16x4xbf16, #tpu.memory_space<vmem>>, vector<16x16x4xbf16>
    %c0_2 = arith.constant 0 : index
    %c0_3 = arith.constant 0 : index
    %c0_4 = arith.constant 0 : index
    %1 = vector.load %arg2[%c0_2, %c0_3, %c0_4] : memref<16x32x4xbf16, #tpu.memory_space<vmem>>, vector<16x32x4xbf16>
    %c0_5 = arith.constant 0 : index
    %c0_6 = arith.constant 0 : index
    %c0_7 = arith.constant 0 : index
    %2 = vector.load %arg3[%c0_5, %c0_6, %c0_7] : memref<16x32x4xbf16, #tpu.memory_space<vmem>>, vector<16x32x4xbf16>
    %cst = arith.constant dense<0.000000e+00> : vector<16x16x32xf32>
    %3 = tpu.matmul %0, %1, %cst {dimension_numbers = #tpu.dot_dimension_numbers<[2], [2], [1], [1], [0, 0, 0, 1, 1, 1], [0], [0]>} : vector<16x16x4xbf16>, vector<16x32x4xbf16>, vector<16x16x32xf32> -> vector<16x16x32xf32>
    %cst_8 = arith.constant 0.353553385 : f32
    %4 = vector.broadcast %cst_8 : f32 to vector<16x16x32xf32>
    %5 = arith.mulf %3, %4 : vector<16x16x32xf32>
    %cst_9 = arith.constant dense<0xFF800000> : vector<16x16xf32>
    %6 = vector.multi_reduction <maximumf>, %5, %cst_9 [2] : vector<16x16x32xf32> to vector<16x16xf32>
    %7 = vector.shape_cast %6 : vector<16x16xf32> to vector<16x16x1xf32>
    %8 = vector.broadcast %7 : vector<16x16x1xf32> to vector<16x16x32xf32>
    %9 = arith.subf %5, %8 : vector<16x16x32xf32>
    %10 = math.exp %9 : vector<16x16x32xf32>
    %cst_10 = arith.constant dense<0.000000e+00> : vector<16x16xf32>
    %11 = vector.multi_reduction <add>, %10, %cst_10 [2] : vector<16x16x32xf32> to vector<16x16xf32>
    %12 = vector.shape_cast %11 : vector<16x16xf32> to vector<16x16x1xf32>
    %13 = arith.truncf %10 : vector<16x16x32xf32> to vector<16x16x32xbf16>
    %cst_11 = arith.constant dense<0.000000e+00> : vector<16x16x4xf32>
    %14 = tpu.matmul %13, %2, %cst_11 {dimension_numbers = #tpu.dot_dimension_numbers<[2], [1], [1], [2], [0, 0, 0, 1, 1, 2], [0], [0]>} : vector<16x16x32xbf16>, vector<16x32x4xbf16>, vector<16x16x4xf32> -> vector<16x16x4xf32>
    %15 = tpu.reciprocal %12 {approx = true} : vector<16x16x1xf32> -> vector<16x16x1xf32>
    %16 = vector.broadcast %15 : vector<16x16x1xf32> to vector<16x16x4xf32>
    %17 = arith.mulf %14, %16 : vector<16x16x4xf32>
    %c0_12 = arith.constant 0 : index
    %c0_13 = arith.constant 0 : index
    %c0_14 = arith.constant 0 : index
    %18 = vector.load %arg4[%c0_12, %c0_13, %c0_14] : memref<16x16x4xf32, #tpu.memory_space<vmem>>, vector<16x16x4xf32>
    tpu.vector_store %arg4[%c0_12, %c0_13, %c0_14], %17 {strides = array<i32>} : memref<16x16x4xf32, #tpu.memory_space<vmem>>, vector<16x16x4xf32>,
    return
  }
  func.func @transform_0(%arg0: i32) -> (i32, i32, i32) {
    %c0_i32 = arith.constant 0 : i32
    %c0_i32_0 = arith.constant 0 : i32
    %c0_i32_1 = arith.constant 0 : i32
    return %arg0, %c0_i32, %c0_i32_0 : i32, i32, i32
  }
  func.func @transform_1(%arg0: i32) -> (i32, i32, i32) {
    %c0_i32 = arith.constant 0 : i32
    %c0_i32_0 = arith.constant 0 : i32
    %c0_i32_1 = arith.constant 0 : i32
    return %arg0, %c0_i32, %c0_i32_0 : i32, i32, i32
  }
  func.func @transform_2(%arg0: i32) -> (i32, i32, i32) {
    %c0_i32 = arith.constant 0 : i32
    %c0_i32_0 = arith.constant 0 : i32
    %c0_i32_1 = arith.constant 0 : i32
    return %arg0, %c0_i32, %c0_i32_0 : i32, i32, i32
  }
  func.func @transform_3(%arg0: i32) -> (i32, i32, i32) {
    %c0_i32 = arith.constant 0 : i32
    %c0_i32_0 = arith.constant 0 : i32
    %c0_i32_1 = arith.constant 0 : i32
    return %arg0, %c0_i32, %c0_i32_0 : i32, i32, i32
  }
}

module attributes {stable_mosaic.version = 11 : i64} {
  func.func @_linear_residual_kernel(%arg0: i32, %arg1: memref<128x8xf32, #tpu.memory_space<vmem>>, %arg2: memref<128x8xf32, #tpu.memory_space<vmem>>, %arg3: memref<8x8xf32, #tpu.memory_space<vmem>>, %arg4: memref<1x8xf32, #tpu.memory_space<vmem>>, %arg5: memref<128x8xf32, #tpu.memory_space<vmem>>) attributes {dimension_semantics = [#tpu.dimension_semantics<parallel>], iteration_bounds = array<i64: 1>, scalar_prefetch = 0 : i64, scratch_operands = 0 : i64, tpu.core_type = #tpu.core_type<tc>, window_params = [{transform_indices = @transform_0, window_bounds = array<i64: 128, 8>}, {transform_indices = @transform_1, window_bounds = array<i64: 128, 8>}, {pipeline_mode = #tpu.pipeline_mode<synchronous>, transform_indices = @transform_2, window_bounds = array<i64: 8, 8>}, {pipeline_mode = #tpu.pipeline_mode<synchronous>, transform_indices = @transform_3, window_bounds = array<i64: 1, 8>}, {transform_indices = @transform_4, window_bounds = array<i64: 128, 8>}]} {
    %c0 = arith.constant 0 : index
    %c0_0 = arith.constant 0 : index
    %0 = vector.load %arg1[%c0, %c0_0] : memref<128x8xf32, #tpu.memory_space<vmem>>, vector<128x8xf32>
    %c0_1 = arith.constant 0 : index
    %c0_2 = arith.constant 0 : index
    %1 = vector.load %arg2[%c0_1, %c0_2] : memref<128x8xf32, #tpu.memory_space<vmem>>, vector<128x8xf32>
    %2 = arith.addf %0, %1 : vector<128x8xf32>
    %c0_3 = arith.constant 0 : index
    %c0_4 = arith.constant 0 : index
    %3 = vector.load %arg3[%c0_3, %c0_4] : memref<8x8xf32, #tpu.memory_space<vmem>>, vector<8x8xf32>
    %cst = arith.constant dense<0.000000e+00> : vector<128x8xf32>
    %4 = tpu.matmul %2, %3, %cst {dimension_numbers = #tpu.dot_dimension_numbers<[1], [0], [0], [1], [0, 0, 1, 1], [], []>} : vector<128x8xf32>, vector<8x8xf32>, vector<128x8xf32> -> vector<128x8xf32>
    %c0_5 = arith.constant 0 : index
    %c0_6 = arith.constant 0 : index
    %5 = vector.load %arg4[%c0_5, %c0_6] : memref<1x8xf32, #tpu.memory_space<vmem>>, vector<1x8xf32>
    %6 = vector.broadcast %5 : vector<1x8xf32> to vector<128x8xf32>
    %7 = arith.addf %4, %6 : vector<128x8xf32>
    %c0_7 = arith.constant 0 : index
    %c0_8 = arith.constant 0 : index
    %8 = vector.load %arg5[%c0_7, %c0_8] : memref<128x8xf32, #tpu.memory_space<vmem>>, vector<128x8xf32>
    tpu.vector_store %arg5[%c0_7, %c0_8], %7 {strides = array<i32>} : memref<128x8xf32, #tpu.memory_space<vmem>>, vector<128x8xf32>,
    return
  }
  func.func @transform_0(%arg0: i32) -> (i32, i32) {
    %c0_i32 = arith.constant 0 : i32
    %c0_i32_0 = arith.constant 0 : i32
    return %arg0, %c0_i32 : i32, i32
  }
  func.func @transform_1(%arg0: i32) -> (i32, i32) {
    %c0_i32 = arith.constant 0 : i32
    %c0_i32_0 = arith.constant 0 : i32
    return %arg0, %c0_i32 : i32, i32
  }
  func.func @transform_2(%arg0: i32) -> (i32, i32) {
    %c0_i32 = arith.constant 0 : i32
    %c0_i32_0 = arith.constant 0 : i32
    %c0_i32_1 = arith.constant 0 : i32
    return %c0_i32, %c0_i32_0 : i32, i32
  }
  func.func @transform_3(%arg0: i32) -> (i32, i32) {
    %c0_i32 = arith.constant 0 : i32
    %c0_i32_0 = arith.constant 0 : i32
    %c0_i32_1 = arith.constant 0 : i32
    return %c0_i32, %c0_i32_0 : i32, i32
  }
  func.func @transform_4(%arg0: i32) -> (i32, i32) {
    %c0_i32 = arith.constant 0 : i32
    %c0_i32_0 = arith.constant 0 : i32
    return %arg0, %c0_i32 : i32, i32
  }
}

</mosaic_0001>

<llo_original>
// kernel: bilevel_routing_attention_nchw.4
$region0: #{bilevel_routing_attention_nchw.4}
  #allocation0 [shape = 'u32[]', space=smem, size = 0x4, offset = 0x4, fixed_abs, tag = 'smem constant byte address 0x4 - core index']
  #allocation1 [shape = 'u32[72,128]{1,0:T(1,128)}', space=vmem, size = 0x9000, scoped, tag = 'internal scratch']
  %s0 = inlined_call_operand.vmem [shape: f32[128,8], index: 0, kind: input, shape index: {}]
  %s1 = inlined_call_operand.vmem [shape: f32[8,24], index: 1, kind: input, shape index: {}]
  %s2 = inlined_call_operand.vmem [shape: f32[1,24], index: 2, kind: input, shape index: {}]
  %s3 = inlined_call_operand.vmem [shape: f32[128,24], index: 3, kind: output, shape index: {}]
  %s4 = sld [smem:[#allocation0]]
  $region22: #{bilevel_routing_attention_nchw.4} parent=0
    _
  %s6 = ssub.s32 1, %s4
  %s7 = scalar_select 0, %s6, %s4
  // Predicated region
  $region2: #{bilevel_routing_attention_nchw.4} parent=0 // pred_check
    _
  $region3: #{bilevel_routing_attention_nchw.4} parent=0 // pred_check_branch
    %9 = sbr.rel (0) target = $region5
  $region4: #{bilevel_routing_attention_nchw.4} parent=0 // pred_region
    _
  $region5: #{bilevel_routing_attention_nchw.4} parent=0 // pred_fallthru
    _
  // Predicated region
  $region6: #{bilevel_routing_attention_nchw.4} parent=0 // pred_check
    _
  $region7: #{bilevel_routing_attention_nchw.4} parent=0 // pred_check_branch
    %11 = sbr.rel (0) target = $region9
  $region8: #{bilevel_routing_attention_nchw.4} parent=0 // pred_region
    _
  $region9: #{bilevel_routing_attention_nchw.4} parent=0 // pred_fallthru
    _
  // Predicated region
  $region10: #{bilevel_routing_attention_nchw.4} parent=0 // pred_check
    _
  $region11: #{bilevel_routing_attention_nchw.4} parent=0 // pred_check_branch
    %13 = sbr.rel (0) target = $region13
  $region12: #{bilevel_routing_attention_nchw.4} parent=0 // pred_region
    _
  $region13: #{bilevel_routing_attention_nchw.4} parent=0 // pred_fallthru
    _
  %v14 = vld [vmem:[%s0] sm:$0xff]
  %v15 = vld [vmem:[%s0 + $0x8] sm:$0xff]
  %v16 = vld [vmem:[%s0 + $0x10] sm:$0xff]
  %v17 = vld [vmem:[%s0 + $0x18] sm:$0xff]
  %v18 = vld [vmem:[%s0 + $0x20] sm:$0xff]
  %v19 = vld [vmem:[%s0 + $0x28] sm:$0xff]
  %v20 = vld [vmem:[%s0 + $0x30] sm:$0xff]
  %v21 = vld [vmem:[%s0 + $0x38] sm:$0xff]
  %v22 = vld [vmem:[%s0 + $0x40] sm:$0xff]
  %v23 = vld [vmem:[%s0 + $0x48] sm:$0xff]
  %v24 = vld [vmem:[%s0 + $0x50] sm:$0xff]
  %v25 = vld [vmem:[%s0 + $0x58] sm:$0xff]
  %v26 = vld [vmem:[%s0 + $0x60] sm:$0xff]
  %v27 = vld [vmem:[%s0 + $0x68] sm:$0xff]
  %v28 = vld [vmem:[%s0 + $0x70] sm:$0xff]
  %v29 = vld [vmem:[%s0 + $0x78] sm:$0xff]
  %v30 = vld [vmem:[%s1] sm:$0xff]
  %v31 = vld [vmem:[%s2] sm:$0x1]
  %v33 = vperm.slane %v31, 0
  %vm35 = vcmask 64512
  %v37 = vsel %vm35, %v14, 0
  %v40 = vsel %vm35, %v15, 0
  %v43 = vsel %vm35, %v16, 0
  %v46 = vsel %vm35, %v17, 0
  %v49 = vsel %vm35, %v18, 0
  %v52 = vsel %vm35, %v19, 0
  %v55 = vsel %vm35, %v20, 0
  %v58 = vsel %vm35, %v21, 0
  %v61 = vsel %vm35, %v22, 0
  %v64 = vsel %vm35, %v23, 0
  %v67 = vsel %vm35, %v24, 0
  %v70 = vsel %vm35, %v25, 0
  %v73 = vsel %vm35, %v26, 0
  %v76 = vsel %vm35, %v27, 0
  %v79 = vsel %vm35, %v28, 0
  %v82 = vsel %vm35, %v29, 0
  %84 = vmatpush.msra.mxu0 0.0
  %85 = vmatpush.msra.mxu0 0.0
  %86 = vmatpush.msra.mxu0 0.0
  %87 = vmatpush.msra.mxu0 0.0
  %88 = vmatpush.msra.mxu0 0.0
  %89 = vmatpush.msra.mxu0 0.0
  %90 = vmatpush.msra.mxu0 0.0
  %91 = vmatpush.msra.mxu0 0.0
  %92 = vmatpush.msra.mxu0 0.0
  %93 = vmatpush.msra.mxu0 0.0
  %94 = vmatpush.msra.mxu0 0.0
  %95 = vmatpush.msra.mxu0 0.0
  %96 = vmatpush.msra.mxu0 0.0
  %97 = vmatpush.msra.mxu0 0.0
  %98 = vmatpush.msra.mxu0 0.0
  %99 = vmatpush.msra.mxu0 %v30
  %100 = vmatmul.f32.gmra.mxu0 %v37
  %v101 = vpop.f32.mrf.mxu0
  %v102 = vadd.f32 %v33, %v101
  %103 = vmatmul.f32.gmra.mxu0 %v40
  %v104 = vpop.f32.mrf.mxu0
  %v105 = vadd.f32 %v33, %v104
  %106 = vmatmul.f32.gmra.mxu0 %v43
  %v107 = vpop.f32.mrf.mxu0
  %v108 = vadd.f32 %v33, %v107
  %109 = vmatmul.f32.gmra.mxu0 %v46
  %v110 = vpop.f32.mrf.mxu0
  %v111 = vadd.f32 %v33, %v110
  %112 = vmatmul.f32.gmra.mxu0 %v49
  %v113 = vpop.f32.mrf.mxu0
  %v114 = vadd.f32 %v33, %v113
  %115 = vmatmul.f32.gmra.mxu0 %v52
  %v116 = vpop.f32.mrf.mxu0
  %v117 = vadd.f32 %v33, %v116
  %118 = vmatmul.f32.gmra.mxu0 %v55
  %v119 = vpop.f32.mrf.mxu0
  %v120 = vadd.f32 %v33, %v119
  %121 = vmatmul.f32.gmra.mxu0 %v58
  %v122 = vpop.f32.mrf.mxu0
  %v123 = vadd.f32 %v33, %v122
  %124 = vmatmul.f32.gmra.mxu0 %v61
  %v125 = vpop.f32.mrf.mxu0
  %v126 = vadd.f32 %v33, %v125
  %127 = vmatmul.f32.gmra.mxu0 %v64
  %v128 = vpop.f32.mrf.mxu0
  %v129 = vadd.f32 %v33, %v128
  %130 = vmatmul.f32.gmra.mxu0 %v67
  %v131 = vpop.f32.mrf.mxu0
  %v132 = vadd.f32 %v33, %v131
  %133 = vmatmul.f32.gmra.mxu0 %v70
  %v134 = vpop.f32.mrf.mxu0
  %v135 = vadd.f32 %v33, %v134
  %136 = vmatmul.f32.gmra.mxu0 %v73
  %v137 = vpop.f32.mrf.mxu0
  %v138 = vadd.f32 %v33, %v137
  %139 = vmatmul.f32.gmra.mxu0 %v76
  %v140 = vpop.f32.mrf.mxu0
  %v141 = vadd.f32 %v33, %v140
  %142 = vmatmul.f32.gmra.mxu0 %v79
  %v143 = vpop.f32.mrf.mxu0
  %v144 = vadd.f32 %v33, %v143
  %145 = vmatmul.f32.gmra.mxu0 %v82
  %v146 = vpop.f32.mrf.mxu0
  %v147 = vadd.f32 %v33, %v146
  %148 = vdwg.mxu0
  %vm149 = vcmask 195584
  %150 = vst.msk [vmem:[%s3] sm:$0xff] %vm149, %v102
  %151 = vst.msk [vmem:[%s3 + $0x8] sm:$0xff] %vm149, %v105
  %152 = vst.msk [vmem:[%s3 + $0x10] sm:$0xff] %vm149, %v108
  %153 = vst.msk [vmem:[%s3 + $0x18] sm:$0xff] %vm149, %v111
  %154 = vst.msk [vmem:[%s3 + $0x20] sm:$0xff] %vm149, %v114
  %155 = vst.msk [vmem:[%s3 + $0x28] sm:$0xff] %vm149, %v117
  %156 = vst.msk [vmem:[%s3 + $0x30] sm:$0xff] %vm149, %v120
  %157 = vst.msk [vmem:[%s3 + $0x38] sm:$0xff] %vm149, %v123
  %158 = vst.msk [vmem:[%s3 + $0x40] sm:$0xff] %vm149, %v126
  %159 = vst.msk [vmem:[%s3 + $0x48] sm:$0xff] %vm149, %v129
  %160 = vst.msk [vmem:[%s3 + $0x50] sm:$0xff] %vm149, %v132
  %161 = vst.msk [vmem:[%s3 + $0x58] sm:$0xff] %vm149, %v135
  %162 = vst.msk [vmem:[%s3 + $0x60] sm:$0xff] %vm149, %v138
  %163 = vst.msk [vmem:[%s3 + $0x68] sm:$0xff] %vm149, %v141
  %164 = vst.msk [vmem:[%s3 + $0x70] sm:$0xff] %vm149, %v144
  %165 = vst.msk [vmem:[%s3 + $0x78] sm:$0xff] %vm149, %v147
  // Predicated region
  $region14: #{bilevel_routing_attention_nchw.4} parent=0 // pred_check
    _
  $region15: #{bilevel_routing_attention_nchw.4} parent=0 // pred_check_branch
    %167 = sbr.rel (0) target = $region17
  $region16: #{bilevel_routing_attention_nchw.4} parent=0 // pred_region
    _
  $region17: #{bilevel_routing_attention_nchw.4} parent=0 // pred_fallthru
    _
  // Predicated region
  $region18: #{bilevel_routing_attention_nchw.4} parent=0 // pred_check
    _
  $region19: #{bilevel_routing_attention_nchw.4} parent=0 // pred_check_branch
    %169 = sbr.rel (0) target = $region21
  $region20: #{bilevel_routing_attention_nchw.4} parent=0 // pred_region
    _
  $region21: #{bilevel_routing_attention_nchw.4} parent=0 // pred_fallthru
    _

// kernel: bilevel_routing_attention_nchw.6
$region0: #{bilevel_routing_attention_nchw.6}
  #allocation0 [shape = 'u32[]', space=smem, size = 0x4, offset = 0x4, fixed_abs, tag = 'smem constant byte address 0x4 - core index']
  #allocation1 [shape = 'u32[72,128]{1,0:T(1,128)}', space=vmem, size = 0x9000, scoped, tag = 'internal scratch']
  %s0 = inlined_call_operand.vmem [shape: f32[2,10,10,8], index: 0, kind: input, shape index: {}]
  %s1 = inlined_call_operand.vmem [shape: f32[9,1,8], index: 1, kind: input, shape index: {}]
  %s2 = inlined_call_operand.vmem [shape: f32[1,8], index: 2, kind: input, shape index: {}]
  %s3 = inlined_call_operand.vmem [shape: f32[2,8,8,8], index: 3, kind: output, shape index: {}]
  %s4 = sld [smem:[#allocation0]]
  $region45: #{bilevel_routing_attention_nchw.6} parent=0
    _
  %s6 = ssub.s32 1, %s4
  %s7 = scalar_select 0, %s6, %s4
  loop: start=0, step=1, limit=4
  $region2: #{bilevel_routing_attention_nchw.6} parent=0 // loop_pre_header
    _
  $region3: #{bilevel_routing_attention_nchw.6} parent=0 // loop_header
    %s9 = sphi 0, %s13
    %p10 = scmp.ge.s32.totalorder %s9, 4
    %s19 = sphi 0, %s21
    %s22 = sphi 0, %s19
    %s23 = sphi 0, %s22
    %s39 = sphi 0, %s23
    %s43 = sphi 0, %s43
    %s45 = sphi 0, %s43
    %s46 = sphi 0, %s45
    %s60 = sphi 0, %s46
    %s64 = sphi 0, %s64
    %s66 = sphi 0, %s64
    %s67 = sphi 0, %s66
    %s81 = sphi 0, %s67
    %s87 = sphi 0, %s89
    %s90 = sphi 0, %s87
    %s91 = sphi 0, %s90
    %s107 = sphi 0, %s91
  $region4: #{bilevel_routing_attention_nchw.6} parent=0 // loop_header_branch
    %12 = sbr.rel (%p10) target = $region8
  $region5: #{bilevel_routing_attention_nchw.6} parent=0 // loop_body
    %s14 = ssub.s32 %s9, 1
    %s15 = ssub.s32 %s9, 2
    %s16 = sadd.s32 %s9, 1
    %s17 = ssub.s32 %s9, %s16
    %p18 = scmp.eq.s32.totalorder %s17, 0
    %s20 = sadd.s32 %s19, 1
    %s21 = scalar_select %p18, %s19, %s20
    %p24 = pneg %p18
    %p25 = scmp.eq.s32.totalorder %s9, 1
    %p26 = por %p24, %p25
    %p27 = scmp.ne.s32.totalorder %s19, %s22
    %p28 = scmp.eq.s32.totalorder %s9, 0
    %p29 = por %p27, %p28
    %p30 = scmp.ne.s32.totalorder %s19, %s22
    %p31 = scmp.eq.s32.totalorder %s14, 1
    %p32 = por %p30, %p31
    %p33 = scmp.ne.s32.totalorder %s22, %s23
    %p34 = scmp.eq.s32.totalorder %s14, 0
    %p35 = por %p33, %p34
    %p36 = scmp.ne.s32.totalorder %s22, %s23
    %p37 = scmp.eq.s32.totalorder %s15, 1
    %p38 = por %p36, %p37
    %p40 = scmp.ne.s32.totalorder %s23, %s39
    %p41 = scmp.eq.s32.totalorder %s15, 0
    %p42 = por %p40, %p41
    %s44 = sadd.s32 %s43, 1
    %p47 = scmp.eq.s32.totalorder %s9, 1
    %p48 = scmp.ne.s32.totalorder %s43, %s45
    %p49 = scmp.eq.s32.totalorder %s9, 0
    %p50 = por %p48, %p49
    %p51 = scmp.ne.s32.totalorder %s43, %s45
    %p52 = scmp.eq.s32.totalorder %s14, 1
    %p53 = por %p51, %p52
    %p54 = scmp.ne.s32.totalorder %s45, %s46
    %p55 = scmp.eq.s32.totalorder %s14, 0
    %p56 = por %p54, %p55
    %p57 = scmp.ne.s32.totalorder %s45, %s46
    %p58 = scmp.eq.s32.totalorder %s15, 1
    %p59 = por %p57, %p58
    %p61 = scmp.ne.s32.totalorder %s46, %s60
    %p62 = scmp.eq.s32.totalorder %s15, 0
    %p63 = por %p61, %p62
    %s65 = sadd.s32 %s64, 1
    %p68 = scmp.eq.s32.totalorder %s9, 1
    %p69 = scmp.ne.s32.totalorder %s64, %s66
    %p70 = scmp.eq.s32.totalorder %s9, 0
    %p71 = por %p69, %p70
    %p72 = scmp.ne.s32.totalorder %s64, %s66
    %p73 = scmp.eq.s32.totalorder %s14, 1
    %p74 = por %p72, %p73
    %p75 = scmp.ne.s32.totalorder %s66, %s67
    %p76 = scmp.eq.s32.totalorder %s14, 0
    %p77 = por %p75, %p76
    %p78 = scmp.ne.s32.totalorder %s66, %s67
    %p79 = scmp.eq.s32.totalorder %s15, 1
    %p80 = por %p78, %p79
    %p82 = scmp.ne.s32.totalorder %s67, %s81
    %p83 = scmp.eq.s32.totalorder %s15, 0
    %p84 = por %p82, %p83
    %s85 = ssub.s32 %s9, %s16
    %p86 = scmp.eq.s32.totalorder %s85, 0
    %s88 = sadd.s32 %s87, 1
    %s89 = scalar_select %p86, %s87, %s88
    %p92 = pneg %p86
    %p93 = scmp.eq.s32.totalorder %s9, 1
    %p94 = por %p92, %p93
    %p95 = scmp.ne.s32.totalorder %s87, %s90
    %p96 = scmp.eq.s32.totalorder %s9, 0
    %p97 = por %p95, %p96
    %p98 = scmp.ne.s32.totalorder %s87, %s90
    %p99 = scmp.eq.s32.totalorder %s14, 1
    %p100 = por %p98, %p99
    %p101 = scmp.ne.s32.totalorder %s90, %s91
    %p102 = scmp.eq.s32.totalorder %s14, 0
    %p103 = por %p101, %p102
    %p104 = scmp.ne.s32.totalorder %s90, %s91
    %p105 = scmp.eq.s32.totalorder %s15, 1
    %p106 = por %p104, %p105
    %p108 = scmp.ne.s32.totalorder %s91, %s107
    %p109 = scmp.eq.s32.totalorder %s15, 0
    %p110 = por %p108, %p109
    %p111 = scmp.le.s32.totalorder 1, %s9
    %p112 = scmp.lt.s32.totalorder %s9, 3
    %p113 = pnand %p111, %p112
    %p114 = pneg %p113
    // Predicated region
    $region9: #{bilevel_routing_attention_nchw.6} parent=5 // pred_check
      _
    $region10: #{bilevel_routing_attention_nchw.6} parent=5 // pred_check_branch
      %116 = sbr.rel (%p113) target = $region12
    $region11: #{bilevel_routing_attention_nchw.6} parent=5 // pred_region
      %s117 = ssub.s32 %s9, 1
      // Predicated region
      $region13: #{bilevel_routing_attention_nchw.6} parent=11 // pred_check
        %p118 = pneg %p56
      $region14: #{bilevel_routing_attention_nchw.6} parent=11 // pred_check_branch
        %120 = sbr.rel (%p118) target = $region16
      $region15: #{bilevel_routing_attention_nchw.6} parent=11 // pred_region
        _
      $region16: #{bilevel_routing_attention_nchw.6} parent=11 // pred_fallthru
        _
      // Predicated region
      $region17: #{bilevel_routing_attention_nchw.6} parent=11 // pred_check
        %p121 = pneg %p77
      $region18: #{bilevel_routing_attention_nchw.6} parent=11 // pred_check_branch
        %123 = sbr.rel (%p121) target = $region20
      $region19: #{bilevel_routing_attention_nchw.6} parent=11 // pred_region
        _
      $region20: #{bilevel_routing_attention_nchw.6} parent=11 // pred_fallthru
        _
    $region12: #{bilevel_routing_attention_nchw.6} parent=5 // pred_fallthru
      _
    %p124 = scmp.lt.s32.totalorder %s9, 2
    // Predicated region
    $region21: #{bilevel_routing_attention_nchw.6} parent=5 // pred_check
      %p125 = pneg %p124
    $region22: #{bilevel_routing_attention_nchw.6} parent=5 // pred_check_branch
      %127 = sbr.rel (%p125) target = $region24
    $region23: #{bilevel_routing_attention_nchw.6} parent=5 // pred_region
      // Predicated region
      $region25: #{bilevel_routing_attention_nchw.6} parent=23 // pred_check
        %p128 = pneg %p29
      $region26: #{bilevel_routing_attention_nchw.6} parent=23 // pred_check_branch
        %130 = sbr.rel (%p128) target = $region28
      $region27: #{bilevel_routing_attention_nchw.6} parent=23 // pred_region
        %p131 = scmp.lt.s32.totalorder %s9, 1
        %s132 = scalar_select %p131, %s9, 1
        %s133 = smul.addr %s132, 20
        %s134 = smul.addr %s133, 8
        %s135 = scalar_lea.vmem %s0, %s134
      $region28: #{bilevel_routing_attention_nchw.6} parent=23 // pred_fallthru
        _
    $region24: #{bilevel_routing_attention_nchw.6} parent=5 // pred_fallthru
      _
    %p136 = scmp.le.s32.totalorder 1, %s9
    %p137 = scmp.lt.s32.totalorder %s9, 3
    %p138 = pnand %p136, %p137
    %p139 = pneg %p138
    // Predicated region
    $region29: #{bilevel_routing_attention_nchw.6} parent=5 // pred_check
      _
    $region30: #{bilevel_routing_attention_nchw.6} parent=5 // pred_check_branch
      %141 = sbr.rel (%p138) target = $region32
    $region31: #{bilevel_routing_attention_nchw.6} parent=5 // pred_region
      %s142 = ssub.s32 %s9, 1
      %p143 = scmp.lt.s32.totalorder %s14, 1
      %s144 = scalar_select %p143, %s14, 1
      %s145 = smul.addr %s144, 20
      %s146 = smul.addr %s145, 8
      %s147 = scalar_lea.vmem %s0, %s146
      %p148 = pneg %p35
      %p149 = pneg %p32
      %p150 = pneg %p56
      %p151 = pneg %p53
      %p152 = pneg %p77
      %p153 = pneg %p74
      %p154 = pneg %p103
      %p155 = pneg %p100
      %p156 = scmp.lt.s32.totalorder %s14, 1
      %s157 = scalar_select %p156, %s14, 1
      %s158 = smul.addr %s157, 8
      %s159 = smul.addr %s158, 8
      %s160 = scalar_lea.vmem %s3, %s159
      %p161 = scmp.lt.s32.totalorder %s14, 1
      %s162 = scalar_select %p161, %s14, 1
      %s163 = smul.addr %s162, 20
      %s164 = smul.addr %s163, 8
      %s165 = scalar_lea.vmem %s0, %s164
      %p166 = scmp.lt.s32.totalorder %s14, 1
      %s167 = scalar_select %p166, %s14, 1
      %s168 = smul.addr %s167, 8
      %s169 = smul.addr %s168, 8
      %s170 = scalar_lea.vmem %s3, %s169
      %v171 = vld [vmem:[%s165] sm:$0xff]
      %v172 = vld [vmem:[%s165 + $0x8] sm:$0x3]
      %v173 = vld [vmem:[%s165 + $0x10] sm:$0xff]
      %v174 = vld [vmem:[%s165 + $0x18] sm:$0x3]
      %v175 = vld [vmem:[%s165 + $0x20] sm:$0xff]
      %v176 = vld [vmem:[%s165 + $0x28] sm:$0x3]
      %v177 = vld [vmem:[%s165 + $0x30] sm:$0xff]
      %v178 = vld [vmem:[%s165 + $0x38] sm:$0x3]
      %v179 = vld [vmem:[%s165 + $0x40] sm:$0xff]
      %v180 = vld [vmem:[%s165 + $0x48] sm:$0x3]
      %v181 = vld [vmem:[%s165 + $0x50] sm:$0xff]
      %v182 = vld [vmem:[%s165 + $0x58] sm:$0x3]
      %v183 = vld [vmem:[%s165 + $0x60] sm:$0xff]
      %v184 = vld [vmem:[%s165 + $0x68] sm:$0x3]
      %v185 = vld [vmem:[%s165 + $0x70] sm:$0xff]
      %v186 = vld [vmem:[%s165 + $0x78] sm:$0x3]
      %v187 = vld [vmem:[%s165 + $0x80] sm:$0xff]
      %v188 = vld [vmem:[%s165 + $0x88] sm:$0x3]
      %v189 = vld [vmem:[%s165 + $0x90] sm:$0xff]
      %v190 = vld [vmem:[%s165 + $0x98] sm:$0x3]
      %v191 = vld [vmem:[%s1] sm:$0x1]
      %v193 = vperm.slane %v191, 0
      %v195 = vmul.f32 %v171, %v193
      %v196 = vmul.f32 %v173, %v193
      %v197 = vmul.f32 %v175, %v193
      %v198 = vmul.f32 %v177, %v193
      %v199 = vmul.f32 %v179, %v193
      %v200 = vmul.f32 %v181, %v193
      %v201 = vmul.f32 %v183, %v193
      %v202 = vmul.f32 %v185, %v193
      %s203 = scalar_lea.vmem %s1, 1
      %v204 = vld [vmem:[%s203] sm:$0x1]
      %v206 = vperm.slane %v204, 0
      %v208 = vmul.f32 %v171, %v206
      %v209 = vmul.f32 %v172, %v206
      %v210 = vmul.f32 %v173, %v206
      %v211 = vmul.f32 %v174, %v206
      %v212 = vmul.f32 %v175, %v206
      %v213 = vmul.f32 %v176, %v206
      %v214 = vmul.f32 %v177, %v206
      %v215 = vmul.f32 %v178, %v206
      %v216 = vmul.f32 %v179, %v206
      %v217 = vmul.f32 %v180, %v206
      %v218 = vmul.f32 %v181, %v206
      %v219 = vmul.f32 %v182, %v206
      %v220 = vmul.f32 %v183, %v206
      %v221 = vmul.f32 %v184, %v206
      %v222 = vmul.f32 %v185, %v206
      %v223 = vmul.f32 %v186, %v206
      %vm240 = vcmask 1046528
      %v241 = vrot.slane %v208, 1
      %v242 = vrot.slane %v209, 1
      %v243 = vsel %vm240, %v241, %v242
      %v244 = vrot.slane %v210, 1
      %v245 = vrot.slane %v211, 1
      %v246 = vsel %vm240, %v244, %v245
      %v247 = vrot.slane %v212, 1
      %v248 = vrot.slane %v213, 1
      %v249 = vsel %vm240, %v247, %v248
      %v250 = vrot.slane %v214, 1
      %v251 = vrot.slane %v215, 1
      %v252 = vsel %vm240, %v250, %v251
      %v253 = vrot.slane %v216, 1
      %v254 = vrot.slane %v217, 1
      %v255 = vsel %vm240, %v253, %v254
      %v256 = vrot.slane %v218, 1
      %v257 = vrot.slane %v219, 1
      %v258 = vsel %vm240, %v256, %v257
      %v259 = vrot.slane %v220, 1
      %v260 = vrot.slane %v221, 1
      %v261 = vsel %vm240, %v259, %v260
      %v262 = vrot.slane %v222, 1
      %v263 = vrot.slane %v223, 1
      %v264 = vsel %vm240, %v262, %v263
      %v273 = vadd.f32 %v195, %v243
      %v274 = vadd.f32 %v196, %v246
      %v275 = vadd.f32 %v197, %v249
      %v276 = vadd.f32 %v198, %v252
      %v277 = vadd.f32 %v199, %v255
      %v278 = vadd.f32 %v200, %v258
      %v279 = vadd.f32 %v201, %v261
      %v280 = vadd.f32 %v202, %v264
      %s281 = scalar_lea.vmem %s1, 2
      %v282 = vld [vmem:[%s281] sm:$0x1]
      %v284 = vperm.slane %v282, 0
      %v286 = vmul.f32 %v171, %v284
      %v287 = vmul.f32 %v172, %v284
      %v288 = vmul.f32 %v173, %v284
      %v289 = vmul.f32 %v174, %v284
      %v290 = vmul.f32 %v175, %v284
      %v291 = vmul.f32 %v176, %v284
      %v292 = vmul.f32 %v177, %v284
      %v293 = vmul.f32 %v178, %v284
      %v294 = vmul.f32 %v179, %v284
      %v295 = vmul.f32 %v180, %v284
      %v296 = vmul.f32 %v181, %v284
      %v297 = vmul.f32 %v182, %v284
      %v298 = vmul.f32 %v183, %v284
      %v299 = vmul.f32 %v184, %v284
      %v300 = vmul.f32 %v185, %v284
      %v301 = vmul.f32 %v186, %v284
      %vm318 = vcmask 1045504
      %v319 = vrot.slane %v286, 2
      %v320 = vrot.slane %v287, 2
      %v321 = vsel %vm318, %v319, %v320
      %v322 = vrot.slane %v288, 2
      %v323 = vrot.slane %v289, 2
      %v324 = vsel %vm318, %v322, %v323
      %v325 = vrot.slane %v290, 2
      %v326 = vrot.slane %v291, 2
      %v327 = vsel %vm318, %v325, %v326
      %v328 = vrot.slane %v292, 2
      %v329 = vrot.slane %v293, 2
      %v330 = vsel %vm318, %v328, %v329
      %v331 = vrot.slane %v294, 2
      %v332 = vrot.slane %v295, 2
      %v333 = vsel %vm318, %v331, %v332
      %v334 = vrot.slane %v296, 2
      %v335 = vrot.slane %v297, 2
      %v336 = vsel %vm318, %v334, %v335
      %v337 = vrot.slane %v298, 2
      %v338 = vrot.slane %v299, 2
      %v339 = vsel %vm318, %v337, %v338
      %v340 = vrot.slane %v300, 2
      %v341 = vrot.slane %v301, 2
      %v342 = vsel %vm318, %v340, %v341
      %v351 = vadd.f32 %v273, %v321
      %v352 = vadd.f32 %v274, %v324
      %v353 = vadd.f32 %v275, %v327
      %v354 = vadd.f32 %v276, %v330
      %v355 = vadd.f32 %v277, %v333
      %v356 = vadd.f32 %v278, %v336
      %v357 = vadd.f32 %v279, %v339
      %v358 = vadd.f32 %v280, %v342
      %s359 = scalar_lea.vmem %s1, 3
      %v360 = vld [vmem:[%s359] sm:$0x1]
      %v362 = vperm.slane %v360, 0
      %v364 = vmul.f32 %v173, %v362
      %v365 = vmul.f32 %v175, %v362
      %v366 = vmul.f32 %v177, %v362
      %v367 = vmul.f32 %v179, %v362
      %v368 = vmul.f32 %v181, %v362
      %v369 = vmul.f32 %v183, %v362
      %v370 = vmul.f32 %v185, %v362
      %v371 = vmul.f32 %v187, %v362
      %v372 = vadd.f32 %v351, %v364
      %v373 = vadd.f32 %v352, %v365
      %v374 = vadd.f32 %v353, %v366
      %v375 = vadd.f32 %v354, %v367
      %v376 = vadd.f32 %v355, %v368
      %v377 = vadd.f32 %v356, %v369
      %v378 = vadd.f32 %v357, %v370
      %v379 = vadd.f32 %v358, %v371
      %s380 = scalar_lea.vmem %s1, 4
      %v381 = vld [vmem:[%s380] sm:$0x1]
      %v383 = vperm.slane %v381, 0
      %v385 = vmul.f32 %v173, %v383
      %v386 = vmul.f32 %v174, %v383
      %v387 = vmul.f32 %v175, %v383
      %v388 = vmul.f32 %v176, %v383
      %v389 = vmul.f32 %v177, %v383
      %v390 = vmul.f32 %v178, %v383
      %v391 = vmul.f32 %v179, %v383
      %v392 = vmul.f32 %v180, %v383
      %v393 = vmul.f32 %v181, %v383
      %v394 = vmul.f32 %v182, %v383
      %v395 = vmul.f32 %v183, %v383
      %v396 = vmul.f32 %v184, %v383
      %v397 = vmul.f32 %v185, %v383
      %v398 = vmul.f32 %v186, %v383
      %v399 = vmul.f32 %v187, %v383
      %v400 = vmul.f32 %v188, %v383
      %v417 = vrot.slane %v385, 1
      %v418 = vrot.slane %v386, 1
      %v419 = vsel %vm240, %v417, %v418
      %v420 = vrot.slane %v387, 1
      %v421 = vrot.slane %v388, 1
      %v422 = vsel %vm240, %v420, %v421
      %v423 = vrot.slane %v389, 1
      %v424 = vrot.slane %v390, 1
      %v425 = vsel %vm240, %v423, %v424
      %v426 = vrot.slane %v391, 1
      %v427 = vrot.slane %v392, 1
      %v428 = vsel %vm240, %v426, %v427
      %v429 = vrot.slane %v393, 1
      %v430 = vrot.slane %v394, 1
      %v431 = vsel %vm240, %v429, %v430
      %v432 = vrot.slane %v395, 1
      %v433 = vrot.slane %v396, 1
      %v434 = vsel %vm240, %v432, %v433
      %v435 = vrot.slane %v397, 1
      %v436 = vrot.slane %v398, 1
      %v437 = vsel %vm240, %v435, %v436
      %v438 = vrot.slane %v399, 1
      %v439 = vrot.slane %v400, 1
      %v440 = vsel %vm240, %v438, %v439
      %v449 = vadd.f32 %v372, %v419
      %v450 = vadd.f32 %v373, %v422
      %v451 = vadd.f32 %v374, %v425
      %v452 = vadd.f32 %v375, %v428
      %v453 = vadd.f32 %v376, %v431
      %v454 = vadd.f32 %v377, %v434
      %v455 = vadd.f32 %v378, %v437
      %v456 = vadd.f32 %v379, %v440
      %s457 = scalar_lea.vmem %s1, 5
      %v458 = vld [vmem:[%s457] sm:$0x1]
      %v460 = vperm.slane %v458, 0
      %v462 = vmul.f32 %v173, %v460
      %v463 = vmul.f32 %v174, %v460
      %v464 = vmul.f32 %v175, %v460
      %v465 = vmul.f32 %v176, %v460
      %v466 = vmul.f32 %v177, %v460
      %v467 = vmul.f32 %v178, %v460
      %v468 = vmul.f32 %v179, %v460
      %v469 = vmul.f32 %v180, %v460
      %v470 = vmul.f32 %v181, %v460
      %v471 = vmul.f32 %v182, %v460
      %v472 = vmul.f32 %v183, %v460
      %v473 = vmul.f32 %v184, %v460
      %v474 = vmul.f32 %v185, %v460
      %v475 = vmul.f32 %v186, %v460
      %v476 = vmul.f32 %v187, %v460
      %v477 = vmul.f32 %v188, %v460
      %v494 = vrot.slane %v462, 2
      %v495 = vrot.slane %v463, 2
      %v496 = vsel %vm318, %v494, %v495
      %v497 = vrot.slane %v464, 2
      %v498 = vrot.slane %v465, 2
      %v499 = vsel %vm318, %v497, %v498
      %v500 = vrot.slane %v466, 2
      %v501 = vrot.slane %v467, 2
      %v502 = vsel %vm318, %v500, %v501
      %v503 = vrot.slane %v468, 2
      %v504 = vrot.slane %v469, 2
      %v505 = vsel %vm318, %v503, %v504
      %v506 = vrot.slane %v470, 2
      %v507 = vrot.slane %v471, 2
      %v508 = vsel %vm318, %v506, %v507
      %v509 = vrot.slane %v472, 2
      %v510 = vrot.slane %v473, 2
      %v511 = vsel %vm318, %v509, %v510
      %v512 = vrot.slane %v474, 2
      %v513 = vrot.slane %v475, 2
      %v514 = vsel %vm318, %v512, %v513
      %v515 = vrot.slane %v476, 2
      %v516 = vrot.slane %v477, 2
      %v517 = vsel %vm318, %v515, %v516
      %v526 = vadd.f32 %v449, %v496
      %v527 = vadd.f32 %v450, %v499
      %v528 = vadd.f32 %v451, %v502
      %v529 = vadd.f32 %v452, %v505
      %v530 = vadd.f32 %v453, %v508
      %v531 = vadd.f32 %v454, %v511
      %v532 = vadd.f32 %v455, %v514
      %v533 = vadd.f32 %v456, %v517
      %s534 = scalar_lea.vmem %s1, 6
      %v535 = vld [vmem:[%s534] sm:$0x1]
      %v537 = vperm.slane %v535, 0
      %v539 = vmul.f32 %v175, %v537
      %v540 = vmul.f32 %v177, %v537
      %v541 = vmul.f32 %v179, %v537
      %v542 = vmul.f32 %v181, %v537
      %v543 = vmul.f32 %v183, %v537
      %v544 = vmul.f32 %v185, %v537
      %v545 = vmul.f32 %v187, %v537
      %v546 = vmul.f32 %v189, %v537
      %v547 = vadd.f32 %v526, %v539
      %v548 = vadd.f32 %v527, %v540
      %v549 = vadd.f32 %v528, %v541
      %v550 = vadd.f32 %v529, %v542
      %v551 = vadd.f32 %v530, %v543
      %v552 = vadd.f32 %v531, %v544
      %v553 = vadd.f32 %v532, %v545
      %v554 = vadd.f32 %v533, %v546
      %s555 = scalar_lea.vmem %s1, 7
      %v556 = vld [vmem:[%s555] sm:$0x1]
      %v558 = vperm.slane %v556, 0
      %v560 = vmul.f32 %v175, %v558
      %v561 = vmul.f32 %v176, %v558
      %v562 = vmul.f32 %v177, %v558
      %v563 = vmul.f32 %v178, %v558
      %v564 = vmul.f32 %v179, %v558
      %v565 = vmul.f32 %v180, %v558
      %v566 = vmul.f32 %v181, %v558
      %v567 = vmul.f32 %v182, %v558
      %v568 = vmul.f32 %v183, %v558
      %v569 = vmul.f32 %v184, %v558
      %v570 = vmul.f32 %v185, %v558
      %v571 = vmul.f32 %v186, %v558
      %v572 = vmul.f32 %v187, %v558
      %v573 = vmul.f32 %v188, %v558
      %v574 = vmul.f32 %v189, %v558
      %v575 = vmul.f32 %v190, %v558
      %v592 = vrot.slane %v560, 1
      %v593 = vrot.slane %v561, 1
      %v594 = vsel %vm240, %v592, %v593
      %v595 = vrot.slane %v562, 1
      %v596 = vrot.slane %v563, 1
      %v597 = vsel %vm240, %v595, %v596
      %v598 = vrot.slane %v564, 1
      %v599 = vrot.slane %v565, 1
      %v600 = vsel %vm240, %v598, %v599
      %v601 = vrot.slane %v566, 1
      %v602 = vrot.slane %v567, 1
      %v603 = vsel %vm240, %v601, %v602
      %v604 = vrot.slane %v568, 1
      %v605 = vrot.slane %v569, 1
      %v606 = vsel %vm240, %v604, %v605
      %v607 = vrot.slane %v570, 1
      %v608 = vrot.slane %v571, 1
      %v609 = vsel %vm240, %v607, %v608
      %v610 = vrot.slane %v572, 1
      %v611 = vrot.slane %v573, 1
      %v612 = vsel %vm240, %v610, %v611
      %v613 = vrot.slane %v574, 1
      %v614 = vrot.slane %v575, 1
      %v615 = vsel %vm240, %v613, %v614
      %v624 = vadd.f32 %v547, %v594
      %v625 = vadd.f32 %v548, %v597
      %v626 = vadd.f32 %v549, %v600
      %v627 = vadd.f32 %v550, %v603
      %v628 = vadd.f32 %v551, %v606
      %v629 = vadd.f32 %v552, %v609
      %v630 = vadd.f32 %v553, %v612
      %v631 = vadd.f32 %v554, %v615
      %s632 = scalar_lea.vmem %s1, 8
      %v633 = vld [vmem:[%s632] sm:$0x1]
      %v635 = vperm.slane %v633, 0
      %v637 = vmul.f32 %v175, %v635
      %v638 = vmul.f32 %v176, %v635
      %v639 = vmul.f32 %v177, %v635
      %v640 = vmul.f32 %v178, %v635
      %v641 = vmul.f32 %v179, %v635
      %v642 = vmul.f32 %v180, %v635
      %v643 = vmul.f32 %v181, %v635
      %v644 = vmul.f32 %v182, %v635
      %v645 = vmul.f32 %v183, %v635
      %v646 = vmul.f32 %v184, %v635
      %v647 = vmul.f32 %v185, %v635
      %v648 = vmul.f32 %v186, %v635
      %v649 = vmul.f32 %v187, %v635
      %v650 = vmul.f32 %v188, %v635
      %v651 = vmul.f32 %v189, %v635
      %v652 = vmul.f32 %v190, %v635
      %v669 = vrot.slane %v637, 2
      %v670 = vrot.slane %v638, 2
      %v671 = vsel %vm318, %v669, %v670
      %v672 = vrot.slane %v639, 2
      %v673 = vrot.slane %v640, 2
      %v674 = vsel %vm318, %v672, %v673
      %v675 = vrot.slane %v641, 2
      %v676 = vrot.slane %v642, 2
      %v677 = vsel %vm318, %v675, %v676
      %v678 = vrot.slane %v643, 2
      %v679 = vrot.slane %v644, 2
      %v680 = vsel %vm318, %v678, %v679
      %v681 = vrot.slane %v645, 2
      %v682 = vrot.slane %v646, 2
      %v683 = vsel %vm318, %v681, %v682
      %v684 = vrot.slane %v647, 2
      %v685 = vrot.slane %v648, 2
      %v686 = vsel %vm318, %v684, %v685
      %v687 = vrot.slane %v649, 2
      %v688 = vrot.slane %v650, 2
      %v689 = vsel %vm318, %v687, %v688
      %v690 = vrot.slane %v651, 2
      %v691 = vrot.slane %v652, 2
      %v692 = vsel %vm318, %v690, %v691
      %v701 = vadd.f32 %v624, %v671
      %v702 = vadd.f32 %v625, %v674
      %v703 = vadd.f32 %v626, %v677
      %v704 = vadd.f32 %v627, %v680
      %v705 = vadd.f32 %v628, %v683
      %v706 = vadd.f32 %v629, %v686
      %v707 = vadd.f32 %v630, %v689
      %v708 = vadd.f32 %v631, %v692
      %v709 = vld [vmem:[%s2] sm:$0x1]
      %v711 = vperm.slane %v709, 0
      %v713 = vadd.f32 %v701, %v711
      %v714 = vadd.f32 %v702, %v711
      %v715 = vadd.f32 %v703, %v711
      %v716 = vadd.f32 %v704, %v711
      %v717 = vadd.f32 %v705, %v711
      %v718 = vadd.f32 %v706, %v711
      %v719 = vadd.f32 %v707, %v711
      %v720 = vadd.f32 %v708, %v711
      %vm721 = vcmask 64512
      %722 = vst.msk [vmem:[%s170] sm:$0xff] %vm721, %v713
      %723 = vst.msk [vmem:[%s170 + $0x8] sm:$0xff] %vm721, %v714
      %724 = vst.msk [vmem:[%s170 + $0x10] sm:$0xff] %vm721, %v715
      %725 = vst.msk [vmem:[%s170 + $0x18] sm:$0xff] %vm721, %v716
      %726 = vst.msk [vmem:[%s170 + $0x20] sm:$0xff] %vm721, %v717
      %727 = vst.msk [vmem:[%s170 + $0x28] sm:$0xff] %vm721, %v718
      %728 = vst.msk [vmem:[%s170 + $0x30] sm:$0xff] %vm721, %v719
      %729 = vst.msk [vmem:[%s170 + $0x38] sm:$0xff] %vm721, %v720
      %p730 = scmp.lt.s32.totalorder %s14, 1
      %s731 = scalar_select %p730, %s14, 1
      %s732 = smul.addr %s731, 8
      %s733 = smul.addr %s732, 8
      %s734 = scalar_lea.vmem %s3, %s733
      // Predicated region
      $region33: #{bilevel_routing_attention_nchw.6} parent=31 // pred_check
        %p735 = pneg %p100
      $region34: #{bilevel_routing_attention_nchw.6} parent=31 // pred_check_branch
        %737 = sbr.rel (%p735) target = $region36
      $region35: #{bilevel_routing_attention_nchw.6} parent=31 // pred_region
        _
      $region36: #{bilevel_routing_attention_nchw.6} parent=31 // pred_fallthru
        _
    $region32: #{bilevel_routing_attention_nchw.6} parent=5 // pred_fallthru
      _
    %p738 = scmp.le.s32.totalorder 2, %s9
    // Predicated region
    $region37: #{bilevel_routing_attention_nchw.6} parent=5 // pred_check
      %p739 = pneg %p738
    $region38: #{bilevel_routing_attention_nchw.6} parent=5 // pred_check_branch
      %741 = sbr.rel (%p739) target = $region40
    $region39: #{bilevel_routing_attention_nchw.6} parent=5 // pred_region
      %s742 = ssub.s32 %s9, 2
      // Predicated region
      $region41: #{bilevel_routing_attention_nchw.6} parent=39 // pred_check
        %p743 = pneg %p106
      $region42: #{bilevel_routing_attention_nchw.6} parent=39 // pred_check_branch
        %745 = sbr.rel (%p743) target = $region44
      $region43: #{bilevel_routing_attention_nchw.6} parent=39 // pred_region
        %p746 = scmp.lt.s32.totalorder %s15, 1
        %s747 = scalar_select %p746, %s15, 1
        %s748 = smul.addr %s747, 8
        %s749 = smul.addr %s748, 8
        %s750 = scalar_lea.vmem %s3, %s749
      $region44: #{bilevel_routing_attention_nchw.6} parent=39 // pred_fallthru
        _
    $region40: #{bilevel_routing_attention_nchw.6} parent=5 // pred_fallthru
      _
  $region6: #{bilevel_routing_attention_nchw.6} parent=0 // loop_footer
    %s13 = sadd.s32 1, %s9
  $region7: #{bilevel_routing_attention_nchw.6} parent=0 // loop_footer_branch
    %8 = sbr.rel target = $region3
  $region8: #{bilevel_routing_attention_nchw.6} parent=0 // loop_exit
    _

// kernel: bilevel_routing_attention_nchw.5
$region0: #{bilevel_routing_attention_nchw.5}
  #allocation0 [shape = 'u32[]', space=smem, size = 0x4, offset = 0x4, fixed_abs, tag = 'smem constant byte address 0x4 - core index']
  #allocation1 [shape = 'u32[72,128]{1,0:T(1,128)}', space=vmem, size = 0x9000, scoped, tag = 'internal scratch']
  %s0 = inlined_call_operand.vmem [shape: bf16[16,16,4], index: 0, kind: input, shape index: {}]
  %s1 = inlined_call_operand.vmem [shape: bf16[16,32,4], index: 1, kind: input, shape index: {}]
  %s2 = inlined_call_operand.vmem [shape: bf16[16,32,4], index: 2, kind: input, shape index: {}]
  %s3 = inlined_call_operand.vmem [shape: f32[16,16,4], index: 3, kind: output, shape index: {}]
  %s4 = sld [smem:[#allocation0]]
  $region22: #{bilevel_routing_attention_nchw.5} parent=0
    _
  %s6 = ssub.s32 1, %s4
  %s7 = scalar_select 0, %s6, %s4
  // Predicated region
  $region2: #{bilevel_routing_attention_nchw.5} parent=0 // pred_check
    _
  $region3: #{bilevel_routing_attention_nchw.5} parent=0 // pred_check_branch
    %9 = sbr.rel (0) target = $region5
  $region4: #{bilevel_routing_attention_nchw.5} parent=0 // pred_region
    _
  $region5: #{bilevel_routing_attention_nchw.5} parent=0 // pred_fallthru
    _
  // Predicated region
  $region6: #{bilevel_routing_attention_nchw.5} parent=0 // pred_check
    _
  $region7: #{bilevel_routing_attention_nchw.5} parent=0 // pred_check_branch
    %11 = sbr.rel (0) target = $region9
  $region8: #{bilevel_routing_attention_nchw.5} parent=0 // pred_region
    _
  $region9: #{bilevel_routing_attention_nchw.5} parent=0 // pred_fallthru
    _
  // Predicated region
  $region10: #{bilevel_routing_attention_nchw.5} parent=0 // pred_check
    _
  $region11: #{bilevel_routing_attention_nchw.5} parent=0 // pred_check_branch
    %13 = sbr.rel (0) target = $region13
  $region12: #{bilevel_routing_attention_nchw.5} parent=0 // pred_region
    _
  $region13: #{bilevel_routing_attention_nchw.5} parent=0 // pred_fallthru
    _
  %v15 = vld [vmem:[%s0] sm:$0xf]
  %v16 = vld [vmem:[%s0 + $0x4] sm:$0xf]
  %v17 = vld [vmem:[%s0 + $0x8] sm:$0xf]
  %v18 = vld [vmem:[%s0 + $0xc] sm:$0xf]
  %v19 = vld [vmem:[%s0 + $0x10] sm:$0xf]
  %v20 = vld [vmem:[%s0 + $0x14] sm:$0xf]
  %v21 = vld [vmem:[%s0 + $0x18] sm:$0xf]
  %v22 = vld [vmem:[%s0 + $0x1c] sm:$0xf]
  %v23 = vld [vmem:[%s0 + $0x20] sm:$0xf]
  %v24 = vld [vmem:[%s0 + $0x24] sm:$0xf]
  %v25 = vld [vmem:[%s0 + $0x28] sm:$0xf]
  %v26 = vld [vmem:[%s0 + $0x2c] sm:$0xf]
  %v27 = vld [vmem:[%s0 + $0x30] sm:$0xf]
  %v28 = vld [vmem:[%s0 + $0x34] sm:$0xf]
  %v29 = vld [vmem:[%s0 + $0x38] sm:$0xf]
  %v30 = vld [vmem:[%s0 + $0x3c] sm:$0xf]
  %v31 = vld [vmem:[%s0 + $0x40] sm:$0xf]
  %v32 = vld [vmem:[%s0 + $0x44] sm:$0xf]
  %v33 = vld [vmem:[%s0 + $0x48] sm:$0xf]
  %v34 = vld [vmem:[%s0 + $0x4c] sm:$0xf]
  %v35 = vld [vmem:[%s0 + $0x50] sm:$0xf]
  %v36 = vld [vmem:[%s0 + $0x54] sm:$0xf]
  %v37 = vld [vmem:[%s0 + $0x58] sm:$0xf]
  %v38 = vld [vmem:[%s0 + $0x5c] sm:$0xf]
  %v39 = vld [vmem:[%s0 + $0x60] sm:$0xf]
  %v40 = vld [vmem:[%s0 + $0x64] sm:$0xf]
  %v41 = vld [vmem:[%s0 + $0x68] sm:$0xf]
  %v42 = vld [vmem:[%s0 + $0x6c] sm:$0xf]
  %v43 = vld [vmem:[%s0 + $0x70] sm:$0xf]
  %v44 = vld [vmem:[%s0 + $0x74] sm:$0xf]
  %v45 = vld [vmem:[%s0 + $0x78] sm:$0xf]
  %v46 = vld [vmem:[%s0 + $0x7c] sm:$0xf]
  %v47 = vld [vmem:[%s1] sm:$0xf]
  %v48 = vld [vmem:[%s1 + $0x4] sm:$0xf]
  %v49 = vld [vmem:[%s1 + $0x8] sm:$0xf]
  %v50 = vld [vmem:[%s1 + $0xc] sm:$0xf]
  %v51 = vld [vmem:[%s1 + $0x10] sm:$0xf]
  %v52 = vld [vmem:[%s1 + $0x14] sm:$0xf]
  %v53 = vld [vmem:[%s1 + $0x18] sm:$0xf]
  %v54 = vld [vmem:[%s1 + $0x1c] sm:$0xf]
  %v55 = vld [vmem:[%s1 + $0x20] sm:$0xf]
  %v56 = vld [vmem:[%s1 + $0x24] sm:$0xf]
  %v57 = vld [vmem:[%s1 + $0x28] sm:$0xf]
  %v58 = vld [vmem:[%s1 + $0x2c] sm:$0xf]
  %v59 = vld [vmem:[%s1 + $0x30] sm:$0xf]
  %v60 = vld [vmem:[%s1 + $0x34] sm:$0xf]
  %v61 = vld [vmem:[%s1 + $0x38] sm:$0xf]
  %v62 = vld [vmem:[%s1 + $0x3c] sm:$0xf]
  %v63 = vld [vmem:[%s1 + $0x40] sm:$0xf]
  %v64 = vld [vmem:[%s1 + $0x44] sm:$0xf]
  %v65 = vld [vmem:[%s1 + $0x48] sm:$0xf]
  %v66 = vld [vmem:[%s1 + $0x4c] sm:$0xf]
  %v67 = vld [vmem:[%s1 + $0x50] sm:$0xf]
  %v68 = vld [vmem:[%s1 + $0x54] sm:$0xf]
  %v69 = vld [vmem:[%s1 + $0x58] sm:$0xf]
  %v70 = vld [vmem:[%s1 + $0x5c] sm:$0xf]
  %v71 = vld [vmem:[%s1 + $0x60] sm:$0xf]
  %v72 = vld [vmem:[%s1 + $0x64] sm:$0xf]
  %v73 = vld [vmem:[%s1 + $0x68] sm:$0xf]
  %v74 = vld [vmem:[%s1 + $0x6c] sm:$0xf]
  %v75 = vld [vmem:[%s1 + $0x70] sm:$0xf]
  %v76 = vld [vmem:[%s1 + $0x74] sm:$0xf]
  %v77 = vld [vmem:[%s1 + $0x78] sm:$0xf]
  %v78 = vld [vmem:[%s1 + $0x7c] sm:$0xf]
  %v79 = vld [vmem:[%s1 + $0x80] sm:$0xf]
  %v80 = vld [vmem:[%s1 + $0x84] sm:$0xf]
  %v81 = vld [vmem:[%s1 + $0x88] sm:$0xf]
  %v82 = vld [vmem:[%s1 + $0x8c] sm:$0xf]
  %v83 = vld [vmem:[%s1 + $0x90] sm:$0xf]
  %v84 = vld [vmem:[%s1 + $0x94] sm:$0xf]
  %v85 = vld [vmem:[%s1 + $0x98] sm:$0xf]
  %v86 = vld [vmem:[%s1 + $0x9c] sm:$0xf]
  %v87 = vld [vmem:[%s1 + $0xa0] sm:$0xf]
  %v88 = vld [vmem:[%s1 + $0xa4] sm:$0xf]
  %v89 = vld [vmem:[%s1 + $0xa8] sm:$0xf]
  %v90 = vld [vmem:[%s1 + $0xac] sm:$0xf]
  %v91 = vld [vmem:[%s1 + $0xb0] sm:$0xf]
  %v92 = vld [vmem:[%s1 + $0xb4] sm:$0xf]
  %v93 = vld [vmem:[%s1 + $0xb8] sm:$0xf]
  %v94 = vld [vmem:[%s1 + $0xbc] sm:$0xf]
  %v95 = vld [vmem:[%s1 + $0xc0] sm:$0xf]
  %v96 = vld [vmem:[%s1 + $0xc4] sm:$0xf]
  %v97 = vld [vmem:[%s1 + $0xc8] sm:$0xf]
  %v98 = vld [vmem:[%s1 + $0xcc] sm:$0xf]
  %v99 = vld [vmem:[%s1 + $0xd0] sm:$0xf]
  %v100 = vld [vmem:[%s1 + $0xd4] sm:$0xf]
  %v101 = vld [vmem:[%s1 + $0xd8] sm:$0xf]
  %v102 = vld [vmem:[%s1 + $0xdc] sm:$0xf]
  %v103 = vld [vmem:[%s1 + $0xe0] sm:$0xf]
  %v104 = vld [vmem:[%s1 + $0xe4] sm:$0xf]
  %v105 = vld [vmem:[%s1 + $0xe8] sm:$0xf]
  %v106 = vld [vmem:[%s1 + $0xec] sm:$0xf]
  %v107 = vld [vmem:[%s1 + $0xf0] sm:$0xf]
  %v108 = vld [vmem:[%s1 + $0xf4] sm:$0xf]
  %v109 = vld [vmem:[%s1 + $0xf8] sm:$0xf]
  %v110 = vld [vmem:[%s1 + $0xfc] sm:$0xf]
  %v111 = vld [vmem:[%s2] sm:$0xf]
  %v112 = vld [vmem:[%s2 + $0x4] sm:$0xf]
  %v113 = vld [vmem:[%s2 + $0x8] sm:$0xf]
  %v114 = vld [vmem:[%s2 + $0xc] sm:$0xf]
  %v115 = vld [vmem:[%s2 + $0x10] sm:$0xf]
  %v116 = vld [vmem:[%s2 + $0x14] sm:$0xf]
  %v117 = vld [vmem:[%s2 + $0x18] sm:$0xf]
  %v118 = vld [vmem:[%s2 + $0x1c] sm:$0xf]
  %v119 = vld [vmem:[%s2 + $0x20] sm:$0xf]
  %v120 = vld [vmem:[%s2 + $0x24] sm:$0xf]
  %v121 = vld [vmem:[%s2 + $0x28] sm:$0xf]
  %v122 = vld [vmem:[%s2 + $0x2c] sm:$0xf]
  %v123 = vld [vmem:[%s2 + $0x30] sm:$0xf]
  %v124 = vld [vmem:[%s2 + $0x34] sm:$0xf]
  %v125 = vld [vmem:[%s2 + $0x38] sm:$0xf]
  %v126 = vld [vmem:[%s2 + $0x3c] sm:$0xf]
  %v127 = vld [vmem:[%s2 + $0x40] sm:$0xf]
  %v128 = vld [vmem:[%s2 + $0x44] sm:$0xf]
  %v129 = vld [vmem:[%s2 + $0x48] sm:$0xf]
  %v130 = vld [vmem:[%s2 + $0x4c] sm:$0xf]
  %v131 = vld [vmem:[%s2 + $0x50] sm:$0xf]
  %v132 = vld [vmem:[%s2 + $0x54] sm:$0xf]
  %v133 = vld [vmem:[%s2 + $0x58] sm:$0xf]
  %v134 = vld [vmem:[%s2 + $0x5c] sm:$0xf]
  %v135 = vld [vmem:[%s2 + $0x60] sm:$0xf]
  %v136 = vld [vmem:[%s2 + $0x64] sm:$0xf]
  %v137 = vld [vmem:[%s2 + $0x68] sm:$0xf]
  %v138 = vld [vmem:[%s2 + $0x6c] sm:$0xf]
  %v139 = vld [vmem:[%s2 + $0x70] sm:$0xf]
  %v140 = vld [vmem:[%s2 + $0x74] sm:$0xf]
  %v141 = vld [vmem:[%s2 + $0x78] sm:$0xf]
  %v142 = vld [vmem:[%s2 + $0x7c] sm:$0xf]
  %v143 = vld [vmem:[%s2 + $0x80] sm:$0xf]
  %v144 = vld [vmem:[%s2 + $0x84] sm:$0xf]
  %v145 = vld [vmem:[%s2 + $0x88] sm:$0xf]
  %v146 = vld [vmem:[%s2 + $0x8c] sm:$0xf]
  %v147 = vld [vmem:[%s2 + $0x90] sm:$0xf]
  %v148 = vld [vmem:[%s2 + $0x94] sm:$0xf]
  %v149 = vld [vmem:[%s2 + $0x98] sm:$0xf]
  %v150 = vld [vmem:[%s2 + $0x9c] sm:$0xf]
  %v151 = vld [vmem:[%s2 + $0xa0] sm:$0xf]
  %v152 = vld [vmem:[%s2 + $0xa4] sm:$0xf]
  %v153 = vld [vmem:[%s2 + $0xa8] sm:$0xf]
  %v154 = vld [vmem:[%s2 + $0xac] sm:$0xf]
  %v155 = vld [vmem:[%s2 + $0xb0] sm:$0xf]
  %v156 = vld [vmem:[%s2 + $0xb4] sm:$0xf]
  %v157 = vld [vmem:[%s2 + $0xb8] sm:$0xf]
  %v158 = vld [vmem:[%s2 + $0xbc] sm:$0xf]
  %v159 = vld [vmem:[%s2 + $0xc0] sm:$0xf]
  %v160 = vld [vmem:[%s2 + $0xc4] sm:$0xf]
  %v161 = vld [vmem:[%s2 + $0xc8] sm:$0xf]
  %v162 = vld [vmem:[%s2 + $0xcc] sm:$0xf]
  %v163 = vld [vmem:[%s2 + $0xd0] sm:$0xf]
  %v164 = vld [vmem:[%s2 + $0xd4] sm:$0xf]
  %v165 = vld [vmem:[%s2 + $0xd8] sm:$0xf]
  %v166 = vld [vmem:[%s2 + $0xdc] sm:$0xf]
  %v167 = vld [vmem:[%s2 + $0xe0] sm:$0xf]
  %v168 = vld [vmem:[%s2 + $0xe4] sm:$0xf]
  %v169 = vld [vmem:[%s2 + $0xe8] sm:$0xf]
  %v170 = vld [vmem:[%s2 + $0xec] sm:$0xf]
  %v171 = vld [vmem:[%s2 + $0xf0] sm:$0xf]
  %v172 = vld [vmem:[%s2 + $0xf4] sm:$0xf]
  %v173 = vld [vmem:[%s2 + $0xf8] sm:$0xf]
  %v174 = vld [vmem:[%s2 + $0xfc] sm:$0xf]
  %v177 = vunpack.c.l.b16 %v15
  %v178 = vunpack.c.l.b16 %v16
  %v179 = vpack.c.b16 %v178, %v177
  %v184 = vunpack.c.l.b16 %v47
  %v185 = vunpack.c.l.b16 %v48
  %v186 = vunpack.c.l.b16 %v49
  %v187 = vunpack.c.l.b16 %v50
  %v188 = vpack.c.b16 %v185, %v184
  %v189 = vpack.c.b16 %v187, %v186
  %vm190 = vcmask 31744
  %v192 = vsel %vm190, %v179, 0
  %v195 = vsel %vm190, %v188, 0
  %v198 = vsel %vm190, %v189, 0
  %200 = vmatpush.bf16.xpose.msra.mxu0 0
  %201 = vmatpush.bf16.xpose.msra.mxu0 0
  %202 = vmatpush.bf16.xpose.msra.mxu0 0
  %203 = vmatpush.bf16.xpose.msra.mxu0 0
  %204 = vmatpush.bf16.xpose.msra.mxu0 0
  %205 = vmatpush.bf16.xpose.msra.mxu0 0
  %206 = vmatpush.bf16.xpose.msra.mxu0 %v198
  %207 = vmatpush.bf16.xpose.msra.mxu0 %v195
  %208 = vmatmul.bf16.gmra.mxu0 %v192
  %v209 = vpop.f32.mrf.mxu0
  %v210 = vadd.f32 0.0, %v209
  %v211 = vpop.f32.mrf.mxu0
  %v212 = vadd.f32 0.0, %v211
  %213 = vdwg.mxu0
  %v216 = vunpack.c.l.b16 %v17
  %v217 = vunpack.c.l.b16 %v18
  %v218 = vpack.c.b16 %v217, %v216
  %v223 = vunpack.c.l.b16 %v51
  %v224 = vunpack.c.l.b16 %v52
  %v225 = vunpack.c.l.b16 %v53
  %v226 = vunpack.c.l.b16 %v54
  %v227 = vpack.c.b16 %v224, %v223
  %v228 = vpack.c.b16 %v226, %v225
  %v230 = vsel %vm190, %v218, 0
  %v233 = vsel %vm190, %v227, 0
  %v236 = vsel %vm190, %v228, 0
  %238 = vmatpush.bf16.xpose.msra.mxu0 0
  %239 = vmatpush.bf16.xpose.msra.mxu0 0
  %240 = vmatpush.bf16.xpose.msra.mxu0 0
  %241 = vmatpush.bf16.xpose.msra.mxu0 0
  %242 = vmatpush.bf16.xpose.msra.mxu0 0
  %243 = vmatpush.bf16.xpose.msra.mxu0 0
  %244 = vmatpush.bf16.xpose.msra.mxu0 %v236
  %245 = vmatpush.bf16.xpose.msra.mxu0 %v233
  %246 = vmatmul.bf16.gmra.mxu0 %v230
  %v247 = vpop.f32.mrf.mxu0
  %v248 = vadd.f32 0.0, %v247
  %v249 = vpop.f32.mrf.mxu0
  %v250 = vadd.f32 0.0, %v249
  %251 = vdwg.mxu0
  %v254 = vunpack.c.l.b16 %v19
  %v255 = vunpack.c.l.b16 %v20
  %v256 = vpack.c.b16 %v255, %v254
  %v261 = vunpack.c.l.b16 %v55
  %v262 = vunpack.c.l.b16 %v56
  %v263 = vunpack.c.l.b16 %v57
  %v264 = vunpack.c.l.b16 %v58
  %v265 = vpack.c.b16 %v262, %v261
  %v266 = vpack.c.b16 %v264, %v263
  %v268 = vsel %vm190, %v256, 0
  %v271 = vsel %vm190, %v265, 0
  %v274 = vsel %vm190, %v266, 0
  %276 = vmatpush.bf16.xpose.msra.mxu0 0
  %277 = vmatpush.bf16.xpose.msra.mxu0 0
  %278 = vmatpush.bf16.xpose.msra.mxu0 0
  %279 = vmatpush.bf16.xpose.msra.mxu0 0
  %280 = vmatpush.bf16.xpose.msra.mxu0 0
  %281 = vmatpush.bf16.xpose.msra.mxu0 0
  %282 = vmatpush.bf16.xpose.msra.mxu0 %v274
  %283 = vmatpush.bf16.xpose.msra.mxu0 %v271
  %284 = vmatmul.bf16.gmra.mxu0 %v268
  %v285 = vpop.f32.mrf.mxu0
  %v286 = vadd.f32 0.0, %v285
  %v287 = vpop.f32.mrf.mxu0
  %v288 = vadd.f32 0.0, %v287
  %289 = vdwg.mxu0
  %v292 = vunpack.c.l.b16 %v21
  %v293 = vunpack.c.l.b16 %v22
  %v294 = vpack.c.b16 %v293, %v292
  %v299 = vunpack.c.l.b16 %v59
  %v300 = vunpack.c.l.b16 %v60
  %v301 = vunpack.c.l.b16 %v61
  %v302 = vunpack.c.l.b16 %v62
  %v303 = vpack.c.b16 %v300, %v299
  %v304 = vpack.c.b16 %v302, %v301
  %v306 = vsel %vm190, %v294, 0
  %v309 = vsel %vm190, %v303, 0
  %v312 = vsel %vm190, %v304, 0
  %314 = vmatpush.bf16.xpose.msra.mxu0 0
  %315 = vmatpush.bf16.xpose.msra.mxu0 0
  %316 = vmatpush.bf16.xpose.msra.mxu0 0
  %317 = vmatpush.bf16.xpose.msra.mxu0 0
  %318 = vmatpush.bf16.xpose.msra.mxu0 0
  %319 = vmatpush.bf16.xpose.msra.mxu0 0
  %320 = vmatpush.bf16.xpose.msra.mxu0 %v312
  %321 = vmatpush.bf16.xpose.msra.mxu0 %v309
  %322 = vmatmul.bf16.gmra.mxu0 %v306
  %v323 = vpop.f32.mrf.mxu0
  %v324 = vadd.f32 0.0, %v323
  %v325 = vpop.f32.mrf.mxu0
  %v326 = vadd.f32 0.0, %v325
  %327 = vdwg.mxu0
  %v330 = vunpack.c.l.b16 %v23
  %v331 = vunpack.c.l.b16 %v24
  %v332 = vpack.c.b16 %v331, %v330
  %v337 = vunpack.c.l.b16 %v63
  %v338 = vunpack.c.l.b16 %v64
  %v339 = vunpack.c.l.b16 %v65
  %v340 = vunpack.c.l.b16 %v66
  %v341 = vpack.c.b16 %v338, %v337
  %v342 = vpack.c.b16 %v340, %v339
  %v344 = vsel %vm190, %v332, 0
  %v347 = vsel %vm190, %v341, 0
  %v350 = vsel %vm190, %v342, 0
  %352 = vmatpush.bf16.xpose.msra.mxu0 0
  %353 = vmatpush.bf16.xpose.msra.mxu0 0
  %354 = vmatpush.bf16.xpose.msra.mxu0 0
  %355 = vmatpush.bf16.xpose.msra.mxu0 0
  %356 = vmatpush.bf16.xpose.msra.mxu0 0
  %357 = vmatpush.bf16.xpose.msra.mxu0 0
  %358 = vmatpush.bf16.xpose.msra.mxu0 %v350
  %359 = vmatpush.bf16.xpose.msra.mxu0 %v347
  %360 = vmatmul.bf16.gmra.mxu0 %v344
  %v361 = vpop.f32.mrf.mxu0
  %v362 = vadd.f32 0.0, %v361
  %v363 = vpop.f32.mrf.mxu0
  %v364 = vadd.f32 0.0, %v363
  %365 = vdwg.mxu0
  %v368 = vunpack.c.l.b16 %v25
  %v369 = vunpack.c.l.b16 %v26
  %v370 = vpack.c.b16 %v369, %v368
  %v375 = vunpack.c.l.b16 %v67
  %v376 = vunpack.c.l.b16 %v68
  %v377 = vunpack.c.l.b16 %v69
  %v378 = vunpack.c.l.b16 %v70
  %v379 = vpack.c.b16 %v376, %v375
  %v380 = vpack.c.b16 %v378, %v377
  %v382 = vsel %vm190, %v370, 0
  %v385 = vsel %vm190, %v379, 0
  %v388 = vsel %vm190, %v380, 0
  %390 = vmatpush.bf16.xpose.msra.mxu0 0
  %391 = vmatpush.bf16.xpose.msra.mxu0 0
  %392 = vmatpush.bf16.xpose.msra.mxu0 0
  %393 = vmatpush.bf16.xpose.msra.mxu0 0
  %394 = vmatpush.bf16.xpose.msra.mxu0 0
  %395 = vmatpush.bf16.xpose.msra.mxu0 0
  %396 = vmatpush.bf16.xpose.msra.mxu0 %v388
  %397 = vmatpush.bf16.xpose.msra.mxu0 %v385
  %398 = vmatmul.bf16.gmra.mxu0 %v382
  %v399 = vpop.f32.mrf.mxu0
  %v400 = vadd.f32 0.0, %v399
  %v401 = vpop.f32.mrf.mxu0
  %v402 = vadd.f32 0.0, %v401
  %403 = vdwg.mxu0
  %v406 = vunpack.c.l.b16 %v27
  %v407 = vunpack.c.l.b16 %v28
  %v408 = vpack.c.b16 %v407, %v406
  %v413 = vunpack.c.l.b16 %v71
  %v414 = vunpack.c.l.b16 %v72
  %v415 = vunpack.c.l.b16 %v73
  %v416 = vunpack.c.l.b16 %v74
  %v417 = vpack.c.b16 %v414, %v413
  %v418 = vpack.c.b16 %v416, %v415
  %v420 = vsel %vm190, %v408, 0
  %v423 = vsel %vm190, %v417, 0
  %v426 = vsel %vm190, %v418, 0
  %428 = vmatpush.bf16.xpose.msra.mxu0 0
  %429 = vmatpush.bf16.xpose.msra.mxu0 0
  %430 = vmatpush.bf16.xpose.msra.mxu0 0
  %431 = vmatpush.bf16.xpose.msra.mxu0 0
  %432 = vmatpush.bf16.xpose.msra.mxu0 0
  %433 = vmatpush.bf16.xpose.msra.mxu0 0
  %434 = vmatpush.bf16.xpose.msra.mxu0 %v426
  %435 = vmatpush.bf16.xpose.msra.mxu0 %v423
  %436 = vmatmul.bf16.gmra.mxu0 %v420
  %v437 = vpop.f32.mrf.mxu0
  %v438 = vadd.f32 0.0, %v437
  %v439 = vpop.f32.mrf.mxu0
  %v440 = vadd.f32 0.0, %v439
  %441 = vdwg.mxu0
  %v444 = vunpack.c.l.b16 %v29
  %v445 = vunpack.c.l.b16 %v30
  %v446 = vpack.c.b16 %v445, %v444
  %v451 = vunpack.c.l.b16 %v75
  %v452 = vunpack.c.l.b16 %v76
  %v453 = vunpack.c.l.b16 %v77
  %v454 = vunpack.c.l.b16 %v78
  %v455 = vpack.c.b16 %v452, %v451
  %v456 = vpack.c.b16 %v454, %v453
  %v458 = vsel %vm190, %v446, 0
  %v461 = vsel %vm190, %v455, 0
  %v464 = vsel %vm190, %v456, 0
  %466 = vmatpush.bf16.xpose.msra.mxu0 0
  %467 = vmatpush.bf16.xpose.msra.mxu0 0
  %468 = vmatpush.bf16.xpose.msra.mxu0 0
  %469 = vmatpush.bf16.xpose.msra.mxu0 0
  %470 = vmatpush.bf16.xpose.msra.mxu0 0
  %471 = vmatpush.bf16.xpose.msra.mxu0 0
  %472 = vmatpush.bf16.xpose.msra.mxu0 %v464
  %473 = vmatpush.bf16.xpose.msra.mxu0 %v461
  %474 = vmatmul.bf16.gmra.mxu0 %v458
  %v475 = vpop.f32.mrf.mxu0
  %v476 = vadd.f32 0.0, %v475
  %v477 = vpop.f32.mrf.mxu0
  %v478 = vadd.f32 0.0, %v477
  %479 = vdwg.mxu0
  %v482 = vunpack.c.l.b16 %v31
  %v483 = vunpack.c.l.b16 %v32
  %v484 = vpack.c.b16 %v483, %v482
  %v489 = vunpack.c.l.b16 %v79
  %v490 = vunpack.c.l.b16 %v80
  %v491 = vunpack.c.l.b16 %v81
  %v492 = vunpack.c.l.b16 %v82
  %v493 = vpack.c.b16 %v490, %v489
  %v494 = vpack.c.b16 %v492, %v491
  %v496 = vsel %vm190, %v484, 0
  %v499 = vsel %vm190, %v493, 0
  %v502 = vsel %vm190, %v494, 0
  %504 = vmatpush.bf16.xpose.msra.mxu0 0
  %505 = vmatpush.bf16.xpose.msra.mxu0 0
  %506 = vmatpush.bf16.xpose.msra.mxu0 0
  %507 = vmatpush.bf16.xpose.msra.mxu0 0
  %508 = vmatpush.bf16.xpose.msra.mxu0 0
  %509 = vmatpush.bf16.xpose.msra.mxu0 0
  %510 = vmatpush.bf16.xpose.msra.mxu0 %v502
  %511 = vmatpush.bf16.xpose.msra.mxu0 %v499
  %512 = vmatmul.bf16.gmra.mxu0 %v496
  %v513 = vpop.f32.mrf.mxu0
  %v514 = vadd.f32 0.0, %v513
  %v515 = vpop.f32.mrf.mxu0
  %v516 = vadd.f32 0.0, %v515
  %517 = vdwg.mxu0
  %v520 = vunpack.c.l.b16 %v33
  %v521 = vunpack.c.l.b16 %v34
  %v522 = vpack.c.b16 %v521, %v520
  %v527 = vunpack.c.l.b16 %v83
  %v528 = vunpack.c.l.b16 %v84
  %v529 = vunpack.c.l.b16 %v85
  %v530 = vunpack.c.l.b16 %v86
  %v531 = vpack.c.b16 %v528, %v527
  %v532 = vpack.c.b16 %v530, %v529
  %v534 = vsel %vm190, %v522, 0
  %v537 = vsel %vm190, %v531, 0
  %v540 = vsel %vm190, %v532, 0
  %542 = vmatpush.bf16.xpose.msra.mxu0 0
  %543 = vmatpush.bf16.xpose.msra.mxu0 0
  %544 = vmatpush.bf16.xpose.msra.mxu0 0
  %545 = vmatpush.bf16.xpose.msra.mxu0 0
  %546 = vmatpush.bf16.xpose.msra.mxu0 0
  %547 = vmatpush.bf16.xpose.msra.mxu0 0
  %548 = vmatpush.bf16.xpose.msra.mxu0 %v540
  %549 = vmatpush.bf16.xpose.msra.mxu0 %v537
  %550 = vmatmul.bf16.gmra.mxu0 %v534
  %v551 = vpop.f32.mrf.mxu0
  %v552 = vadd.f32 0.0, %v551
  %v553 = vpop.f32.mrf.mxu0
  %v554 = vadd.f32 0.0, %v553
  %555 = vdwg.mxu0
  %v558 = vunpack.c.l.b16 %v35
  %v559 = vunpack.c.l.b16 %v36
  %v560 = vpack.c.b16 %v559, %v558
  %v565 = vunpack.c.l.b16 %v87
  %v566 = vunpack.c.l.b16 %v88
  %v567 = vunpack.c.l.b16 %v89
  %v568 = vunpack.c.l.b16 %v90
  %v569 = vpack.c.b16 %v566, %v565
  %v570 = vpack.c.b16 %v568, %v567
  %v572 = vsel %vm190, %v560, 0
  %v575 = vsel %vm190, %v569, 0
  %v578 = vsel %vm190, %v570, 0
  %580 = vmatpush.bf16.xpose.msra.mxu0 0
  %581 = vmatpush.bf16.xpose.msra.mxu0 0
  %582 = vmatpush.bf16.xpose.msra.mxu0 0
  %583 = vmatpush.bf16.xpose.msra.mxu0 0
  %584 = vmatpush.bf16.xpose.msra.mxu0 0
  %585 = vmatpush.bf16.xpose.msra.mxu0 0
  %586 = vmatpush.bf16.xpose.msra.mxu0 %v578
  %587 = vmatpush.bf16.xpose.msra.mxu0 %v575
  %588 = vmatmul.bf16.gmra.mxu0 %v572
  %v589 = vpop.f32.mrf.mxu0
  %v590 = vadd.f32 0.0, %v589
  %v591 = vpop.f32.mrf.mxu0
  %v592 = vadd.f32 0.0, %v591
  %593 = vdwg.mxu0
  %v596 = vunpack.c.l.b16 %v37
  %v597 = vunpack.c.l.b16 %v38
  %v598 = vpack.c.b16 %v597, %v596
  %v603 = vunpack.c.l.b16 %v91
  %v604 = vunpack.c.l.b16 %v92
  %v605 = vunpack.c.l.b16 %v93
  %v606 = vunpack.c.l.b16 %v94
  %v607 = vpack.c.b16 %v604, %v603
  %v608 = vpack.c.b16 %v606, %v605
  %v610 = vsel %vm190, %v598, 0
  %v613 = vsel %vm190, %v607, 0
  %v616 = vsel %vm190, %v608, 0
  %618 = vmatpush.bf16.xpose.msra.mxu0 0
  %619 = vmatpush.bf16.xpose.msra.mxu0 0
  %620 = vmatpush.bf16.xpose.msra.mxu0 0
  %621 = vmatpush.bf16.xpose.msra.mxu0 0
  %622 = vmatpush.bf16.xpose.msra.mxu0 0
  %623 = vmatpush.bf16.xpose.msra.mxu0 0
  %624 = vmatpush.bf16.xpose.msra.mxu0 %v616
  %625 = vmatpush.bf16.xpose.msra.mxu0 %v613
  %626 = vmatmul.bf16.gmra.mxu0 %v610
  %v627 = vpop.f32.mrf.mxu0
  %v628 = vadd.f32 0.0, %v627
  %v629 = vpop.f32.mrf.mxu0
  %v630 = vadd.f32 0.0, %v629
  %631 = vdwg.mxu0
  %v634 = vunpack.c.l.b16 %v39
  %v635 = vunpack.c.l.b16 %v40
  %v636 = vpack.c.b16 %v635, %v634
  %v641 = vunpack.c.l.b16 %v95
  %v642 = vunpack.c.l.b16 %v96
  %v643 = vunpack.c.l.b16 %v97
  %v644 = vunpack.c.l.b16 %v98
  %v645 = vpack.c.b16 %v642, %v641
  %v646 = vpack.c.b16 %v644, %v643
  %v648 = vsel %vm190, %v636, 0
  %v651 = vsel %vm190, %v645, 0
  %v654 = vsel %vm190, %v646, 0
  %656 = vmatpush.bf16.xpose.msra.mxu0 0
  %657 = vmatpush.bf16.xpose.msra.mxu0 0
  %658 = vmatpush.bf16.xpose.msra.mxu0 0
  %659 = vmatpush.bf16.xpose.msra.mxu0 0
  %660 = vmatpush.bf16.xpose.msra.mxu0 0
  %661 = vmatpush.bf16.xpose.msra.mxu0 0
  %662 = vmatpush.bf16.xpose.msra.mxu0 %v654
  %663 = vmatpush.bf16.xpose.msra.mxu0 %v651
  %664 = vmatmul.bf16.gmra.mxu0 %v648
  %v665 = vpop.f32.mrf.mxu0
  %v666 = vadd.f32 0.0, %v665
  %v667 = vpop.f32.mrf.mxu0
  %v668 = vadd.f32 0.0, %v667
  %669 = vdwg.mxu0
  %v672 = vunpack.c.l.b16 %v41
  %v673 = vunpack.c.l.b16 %v42
  %v674 = vpack.c.b16 %v673, %v672
  %v679 = vunpack.c.l.b16 %v99
  %v680 = vunpack.c.l.b16 %v100
  %v681 = vunpack.c.l.b16 %v101
  %v682 = vunpack.c.l.b16 %v102
  %v683 = vpack.c.b16 %v680, %v679
  %v684 = vpack.c.b16 %v682, %v681
  %v686 = vsel %vm190, %v674, 0
  %v689 = vsel %vm190, %v683, 0
  %v692 = vsel %vm190, %v684, 0
  %694 = vmatpush.bf16.xpose.msra.mxu0 0
  %695 = vmatpush.bf16.xpose.msra.mxu0 0
  %696 = vmatpush.bf16.xpose.msra.mxu0 0
  %697 = vmatpush.bf16.xpose.msra.mxu0 0
  %698 = vmatpush.bf16.xpose.msra.mxu0 0
  %699 = vmatpush.bf16.xpose.msra.mxu0 0
  %700 = vmatpush.bf16.xpose.msra.mxu0 %v692
  %701 = vmatpush.bf16.xpose.msra.mxu0 %v689
  %702 = vmatmul.bf16.gmra.mxu0 %v686
  %v703 = vpop.f32.mrf.mxu0
  %v704 = vadd.f32 0.0, %v703
  %v705 = vpop.f32.mrf.mxu0
  %v706 = vadd.f32 0.0, %v705
  %707 = vdwg.mxu0
  %v710 = vunpack.c.l.b16 %v43
  %v711 = vunpack.c.l.b16 %v44
  %v712 = vpack.c.b16 %v711, %v710
  %v717 = vunpack.c.l.b16 %v103
  %v718 = vunpack.c.l.b16 %v104
  %v719 = vunpack.c.l.b16 %v105
  %v720 = vunpack.c.l.b16 %v106
  %v721 = vpack.c.b16 %v718, %v717
  %v722 = vpack.c.b16 %v720, %v719
  %v724 = vsel %vm190, %v712, 0
  %v727 = vsel %vm190, %v721, 0
  %v730 = vsel %vm190, %v722, 0
  %732 = vmatpush.bf16.xpose.msra.mxu0 0
  %733 = vmatpush.bf16.xpose.msra.mxu0 0
  %734 = vmatpush.bf16.xpose.msra.mxu0 0
  %735 = vmatpush.bf16.xpose.msra.mxu0 0
  %736 = vmatpush.bf16.xpose.msra.mxu0 0
  %737 = vmatpush.bf16.xpose.msra.mxu0 0
  %738 = vmatpush.bf16.xpose.msra.mxu0 %v730
  %739 = vmatpush.bf16.xpose.msra.mxu0 %v727
  %740 = vmatmul.bf16.gmra.mxu0 %v724
  %v741 = vpop.f32.mrf.mxu0
  %v742 = vadd.f32 0.0, %v741
  %v743 = vpop.f32.mrf.mxu0
  %v744 = vadd.f32 0.0, %v743
  %745 = vdwg.mxu0
  %v748 = vunpack.c.l.b16 %v45
  %v749 = vunpack.c.l.b16 %v46
  %v750 = vpack.c.b16 %v749, %v748
  %v755 = vunpack.c.l.b16 %v107
  %v756 = vunpack.c.l.b16 %v108
  %v757 = vunpack.c.l.b16 %v109
  %v758 = vunpack.c.l.b16 %v110
  %v759 = vpack.c.b16 %v756, %v755
  %v760 = vpack.c.b16 %v758, %v757
  %v762 = vsel %vm190, %v750, 0
  %v765 = vsel %vm190, %v759, 0
  %v768 = vsel %vm190, %v760, 0
  %770 = vmatpush.bf16.xpose.msra.mxu0 0
  %771 = vmatpush.bf16.xpose.msra.mxu0 0
  %772 = vmatpush.bf16.xpose.msra.mxu0 0
  %773 = vmatpush.bf16.xpose.msra.mxu0 0
  %774 = vmatpush.bf16.xpose.msra.mxu0 0
  %775 = vmatpush.bf16.xpose.msra.mxu0 0
  %776 = vmatpush.bf16.xpose.msra.mxu0 %v768
  %777 = vmatpush.bf16.xpose.msra.mxu0 %v765
  %778 = vmatmul.bf16.gmra.mxu0 %v762
  %v779 = vpop.f32.mrf.mxu0
  %v780 = vadd.f32 0.0, %v779
  %v781 = vpop.f32.mrf.mxu0
  %v782 = vadd.f32 0.0, %v781
  %783 = vdwg.mxu0
  %v784 = vmul.f32 %v210, 0.35355338
  %v785 = vmul.f32 %v212, 0.35355338
  %v786 = vmul.f32 %v248, 0.35355338
  %v787 = vmul.f32 %v250, 0.35355338
  %v788 = vmul.f32 %v286, 0.35355338
  %v789 = vmul.f32 %v288, 0.35355338
  %v790 = vmul.f32 %v324, 0.35355338
  %v791 = vmul.f32 %v326, 0.35355338
  %v792 = vmul.f32 %v362, 0.35355338
  %v793 = vmul.f32 %v364, 0.35355338
  %v794 = vmul.f32 %v400, 0.35355338
  %v795 = vmul.f32 %v402, 0.35355338
  %v796 = vmul.f32 %v438, 0.35355338
  %v797 = vmul.f32 %v440, 0.35355338
  %v798 = vmul.f32 %v476, 0.35355338
  %v799 = vmul.f32 %v478, 0.35355338
  %v800 = vmul.f32 %v514, 0.35355338
  %v801 = vmul.f32 %v516, 0.35355338
  %v802 = vmul.f32 %v552, 0.35355338
  %v803 = vmul.f32 %v554, 0.35355338
  %v804 = vmul.f32 %v590, 0.35355338
  %v805 = vmul.f32 %v592, 0.35355338
  %v806 = vmul.f32 %v628, 0.35355338
  %v807 = vmul.f32 %v630, 0.35355338
  %v808 = vmul.f32 %v666, 0.35355338
  %v809 = vmul.f32 %v668, 0.35355338
  %v810 = vmul.f32 %v704, 0.35355338
  %v811 = vmul.f32 %v706, 0.35355338
  %v812 = vmul.f32 %v742, 0.35355338
  %v813 = vmul.f32 %v744, 0.35355338
  %v814 = vmul.f32 %v780, 0.35355338
  %v815 = vmul.f32 %v782, 0.35355338
  %vm816 = vcmask 261120
  %v817 = vsel %vm816, %v784, -inf
  %818 = vmax.xlane.f32.xlu0 %v817
  %v819 = vpop.xlane.xlu0 %818
  %v820 = vsel %vm816, %v785, -inf
  %821 = vmax.xlane.f32.xlu0 %v820
  %v822 = vpop.xlane.xlu0 %821
  %v823 = vsel %vm816, %v786, -inf
  %824 = vmax.xlane.f32.xlu0 %v823
  %v825 = vpop.xlane.xlu0 %824
  %v826 = vsel %vm816, %v787, -inf
  %827 = vmax.xlane.f32.xlu0 %v826
  %v828 = vpop.xlane.xlu0 %827
  %v829 = vsel %vm816, %v788, -inf
  %830 = vmax.xlane.f32.xlu0 %v829
  %v831 = vpop.xlane.xlu0 %830
  %v832 = vsel %vm816, %v789, -inf
  %833 = vmax.xlane.f32.xlu0 %v832
  %v834 = vpop.xlane.xlu0 %833
  %v835 = vsel %vm816, %v790, -inf
  %836 = vmax.xlane.f32.xlu0 %v835
  %v837 = vpop.xlane.xlu0 %836
  %v838 = vsel %vm816, %v791, -inf
  %839 = vmax.xlane.f32.xlu0 %v838
  %v840 = vpop.xlane.xlu0 %839
  %v841 = vsel %vm816, %v792, -inf
  %842 = vmax.xlane.f32.xlu0 %v841
  %v843 = vpop.xlane.xlu0 %842
  %v844 = vsel %vm816, %v793, -inf
  %845 = vmax.xlane.f32.xlu0 %v844
  %v846 = vpop.xlane.xlu0 %845
  %v847 = vsel %vm816, %v794, -inf
  %848 = vmax.xlane.f32.xlu0 %v847
  %v849 = vpop.xlane.xlu0 %848
  %v850 = vsel %vm816, %v795, -inf
  %851 = vmax.xlane.f32.xlu0 %v850
  %v852 = vpop.xlane.xlu0 %851
  %v853 = vsel %vm816, %v796, -inf
  %854 = vmax.xlane.f32.xlu0 %v853
  %v855 = vpop.xlane.xlu0 %854
  %v856 = vsel %vm816, %v797, -inf
  %857 = vmax.xlane.f32.xlu0 %v856
  %v858 = vpop.xlane.xlu0 %857
  %v859 = vsel %vm816, %v798, -inf
  %860 = vmax.xlane.f32.xlu0 %v859
  %v861 = vpop.xlane.xlu0 %860
  %v862 = vsel %vm816, %v799, -inf
  %863 = vmax.xlane.f32.xlu0 %v862
  %v864 = vpop.xlane.xlu0 %863
  %v865 = vsel %vm816, %v800, -inf
  %866 = vmax.xlane.f32.xlu0 %v865
  %v867 = vpop.xlane.xlu0 %866
  %v868 = vsel %vm816, %v801, -inf
  %869 = vmax.xlane.f32.xlu0 %v868
  %v870 = vpop.xlane.xlu0 %869
  %v871 = vsel %vm816, %v802, -inf
  %872 = vmax.xlane.f32.xlu0 %v871
  %v873 = vpop.xlane.xlu0 %872
  %v874 = vsel %vm816, %v803, -inf
  %875 = vmax.xlane.f32.xlu0 %v874
  %v876 = vpop.xlane.xlu0 %875
  %v877 = vsel %vm816, %v804, -inf
  %878 = vmax.xlane.f32.xlu0 %v877
  %v879 = vpop.xlane.xlu0 %878
  %v880 = vsel %vm816, %v805, -inf
  %881 = vmax.xlane.f32.xlu0 %v880
  %v882 = vpop.xlane.xlu0 %881
  %v883 = vsel %vm816, %v806, -inf
  %884 = vmax.xlane.f32.xlu0 %v883
  %v885 = vpop.xlane.xlu0 %884
  %v886 = vsel %vm816, %v807, -inf
  %887 = vmax.xlane.f32.xlu0 %v886
  %v888 = vpop.xlane.xlu0 %887
  %v889 = vsel %vm816, %v808, -inf
  %890 = vmax.xlane.f32.xlu0 %v889
  %v891 = vpop.xlane.xlu0 %890
  %v892 = vsel %vm816, %v809, -inf
  %893 = vmax.xlane.f32.xlu0 %v892
  %v894 = vpop.xlane.xlu0 %893
  %v895 = vsel %vm816, %v810, -inf
  %896 = vmax.xlane.f32.xlu0 %v895
  %v897 = vpop.xlane.xlu0 %896
  %v898 = vsel %vm816, %v811, -inf
  %899 = vmax.xlane.f32.xlu0 %v898
  %v900 = vpop.xlane.xlu0 %899
  %v901 = vsel %vm816, %v812, -inf
  %902 = vmax.xlane.f32.xlu0 %v901
  %v903 = vpop.xlane.xlu0 %902
  %v904 = vsel %vm816, %v813, -inf
  %905 = vmax.xlane.f32.xlu0 %v904
  %v906 = vpop.xlane.xlu0 %905
  %v907 = vsel %vm816, %v814, -inf
  %908 = vmax.xlane.f32.xlu0 %v907
  %v909 = vpop.xlane.xlu0 %908
  %v910 = vsel %vm816, %v815, -inf
  %911 = vmax.xlane.f32.xlu0 %v910
  %v912 = vpop.xlane.xlu0 %911
  %v913 = vsub.f32 %v784, %v819
  %v914 = vsub.f32 %v785, %v822
  %v915 = vsub.f32 %v786, %v825
  %v916 = vsub.f32 %v787, %v828
  %v917 = vsub.f32 %v788, %v831
  %v918 = vsub.f32 %v789, %v834
  %v919 = vsub.f32 %v790, %v837
  %v920 = vsub.f32 %v791, %v840
  %v921 = vsub.f32 %v792, %v843
  %v922 = vsub.f32 %v793, %v846
  %v923 = vsub.f32 %v794, %v849
  %v924 = vsub.f32 %v795, %v852
  %v925 = vsub.f32 %v796, %v855
  %v926 = vsub.f32 %v797, %v858
  %v927 = vsub.f32 %v798, %v861
  %v928 = vsub.f32 %v799, %v864
  %v929 = vsub.f32 %v800, %v867
  %v930 = vsub.f32 %v801, %v870
  %v931 = vsub.f32 %v802, %v873
  %v932 = vsub.f32 %v803, %v876
  %v933 = vsub.f32 %v804, %v879
  %v934 = vsub.f32 %v805, %v882
  %v935 = vsub.f32 %v806, %v885
  %v936 = vsub.f32 %v807, %v888
  %v937 = vsub.f32 %v808, %v891
  %v938 = vsub.f32 %v809, %v894
  %v939 = vsub.f32 %v810, %v897
  %v940 = vsub.f32 %v811, %v900
  %v941 = vsub.f32 %v812, %v903
  %v942 = vsub.f32 %v813, %v906
  %v943 = vsub.f32 %v814, %v909
  %v944 = vsub.f32 %v815, %v912
  %v945 = vmul.f32 %v913, 1.442695
  %v946 = vpow.pop %v945
  %v947 = vmul.f32 %v914, 1.442695
  %v948 = vpow.pop %v947
  %v949 = vmul.f32 %v915, 1.442695
  %v950 = vpow.pop %v949
  %v951 = vmul.f32 %v916, 1.442695
  %v952 = vpow.pop %v951
  %v953 = vmul.f32 %v917, 1.442695
  %v954 = vpow.pop %v953
  %v955 = vmul.f32 %v918, 1.442695
  %v956 = vpow.pop %v955
  %v957 = vmul.f32 %v919, 1.442695
  %v958 = vpow.pop %v957
  %v959 = vmul.f32 %v920, 1.442695
  %v960 = vpow.pop %v959
  %v961 = vmul.f32 %v921, 1.442695
  %v962 = vpow.pop %v961
  %v963 = vmul.f32 %v922, 1.442695
  %v964 = vpow.pop %v963
  %v965 = vmul.f32 %v923, 1.442695
  %v966 = vpow.pop %v965
  %v967 = vmul.f32 %v924, 1.442695
  %v968 = vpow.pop %v967
  %v969 = vmul.f32 %v925, 1.442695
  %v970 = vpow.pop %v969
  %v971 = vmul.f32 %v926, 1.442695
  %v972 = vpow.pop %v971
  %v973 = vmul.f32 %v927, 1.442695
  %v974 = vpow.pop %v973
  %v975 = vmul.f32 %v928, 1.442695
  %v976 = vpow.pop %v975
  %v977 = vmul.f32 %v929, 1.442695
  %v978 = vpow.pop %v977
  %v979 = vmul.f32 %v930, 1.442695
  %v980 = vpow.pop %v979
  %v981 = vmul.f32 %v931, 1.442695
  %v982 = vpow.pop %v981
  %v983 = vmul.f32 %v932, 1.442695
  %v984 = vpow.pop %v983
  %v985 = vmul.f32 %v933, 1.442695
  %v986 = vpow.pop %v985
  %v987 = vmul.f32 %v934, 1.442695
  %v988 = vpow.pop %v987
  %v989 = vmul.f32 %v935, 1.442695
  %v990 = vpow.pop %v989
  %v991 = vmul.f32 %v936, 1.442695
  %v992 = vpow.pop %v991
  %v993 = vmul.f32 %v937, 1.442695
  %v994 = vpow.pop %v993
  %v995 = vmul.f32 %v938, 1.442695
  %v996 = vpow.pop %v995
  %v997 = vmul.f32 %v939, 1.442695
  %v998 = vpow.pop %v997
  %v999 = vmul.f32 %v940, 1.442695
  %v1000 = vpow.pop %v999
  %v1001 = vmul.f32 %v941, 1.442695
  %v1002 = vpow.pop %v1001
  %v1003 = vmul.f32 %v942, 1.442695
  %v1004 = vpow.pop %v1003
  %v1005 = vmul.f32 %v943, 1.442695
  %v1006 = vpow.pop %v1005
  %v1007 = vmul.f32 %v944, 1.442695
  %v1008 = vpow.pop %v1007
  %v1009 = vsel %vm816, %v946, 0.0
  %1010 = vadd.xlane.f32.xlu0 %v1009
  %v1011 = vpop.xlane.xlu0 %1010
  %v1012 = vsel %vm816, %v948, 0.0
  %1013 = vadd.xlane.f32.xlu0 %v1012
  %v1014 = vpop.xlane.xlu0 %1013
  %v1015 = vsel %vm816, %v950, 0.0
  %1016 = vadd.xlane.f32.xlu0 %v1015
  %v1017 = vpop.xlane.xlu0 %1016
  %v1018 = vsel %vm816, %v952, 0.0
  %1019 = vadd.xlane.f32.xlu0 %v1018
  %v1020 = vpop.xlane.xlu0 %1019
  %v1021 = vsel %vm816, %v954, 0.0
  %1022 = vadd.xlane.f32.xlu0 %v1021
  %v1023 = vpop.xlane.xlu0 %1022
  %v1024 = vsel %vm816, %v956, 0.0
  %1025 = vadd.xlane.f32.xlu0 %v1024
  %v1026 = vpop.xlane.xlu0 %1025
  %v1027 = vsel %vm816, %v958, 0.0
  %1028 = vadd.xlane.f32.xlu0 %v1027
  %v1029 = vpop.xlane.xlu0 %1028
  %v1030 = vsel %vm816, %v960, 0.0
  %1031 = vadd.xlane.f32.xlu0 %v1030
  %v1032 = vpop.xlane.xlu0 %1031
  %v1033 = vsel %vm816, %v962, 0.0
  %1034 = vadd.xlane.f32.xlu0 %v1033
  %v1035 = vpop.xlane.xlu0 %1034
  %v1036 = vsel %vm816, %v964, 0.0
  %1037 = vadd.xlane.f32.xlu0 %v1036
  %v1038 = vpop.xlane.xlu0 %1037
  %v1039 = vsel %vm816, %v966, 0.0
  %1040 = vadd.xlane.f32.xlu0 %v1039
  %v1041 = vpop.xlane.xlu0 %1040
  %v1042 = vsel %vm816, %v968, 0.0
  %1043 = vadd.xlane.f32.xlu0 %v1042
  %v1044 = vpop.xlane.xlu0 %1043
  %v1045 = vsel %vm816, %v970, 0.0
  %1046 = vadd.xlane.f32.xlu0 %v1045
  %v1047 = vpop.xlane.xlu0 %1046
  %v1048 = vsel %vm816, %v972, 0.0
  %1049 = vadd.xlane.f32.xlu0 %v1048
  %v1050 = vpop.xlane.xlu0 %1049
  %v1051 = vsel %vm816, %v974, 0.0
  %1052 = vadd.xlane.f32.xlu0 %v1051
  %v1053 = vpop.xlane.xlu0 %1052
  %v1054 = vsel %vm816, %v976, 0.0
  %1055 = vadd.xlane.f32.xlu0 %v1054
  %v1056 = vpop.xlane.xlu0 %1055
  %v1057 = vsel %vm816, %v978, 0.0
  %1058 = vadd.xlane.f32.xlu0 %v1057
  %v1059 = vpop.xlane.xlu0 %1058
  %v1060 = vsel %vm816, %v980, 0.0
  %1061 = vadd.xlane.f32.xlu0 %v1060
  %v1062 = vpop.xlane.xlu0 %1061
  %v1063 = vsel %vm816, %v982, 0.0
  %1064 = vadd.xlane.f32.xlu0 %v1063
  %v1065 = vpop.xlane.xlu0 %1064
  %v1066 = vsel %vm816, %v984, 0.0
  %1067 = vadd.xlane.f32.xlu0 %v1066
  %v1068 = vpop.xlane.xlu0 %1067
  %v1069 = vsel %vm816, %v986, 0.0
  %1070 = vadd.xlane.f32.xlu0 %v1069
  %v1071 = vpop.xlane.xlu0 %1070
  %v1072 = vsel %vm816, %v988, 0.0
  %1073 = vadd.xlane.f32.xlu0 %v1072
  %v1074 = vpop.xlane.xlu0 %1073
  %v1075 = vsel %vm816, %v990, 0.0
  %1076 = vadd.xlane.f32.xlu0 %v1075
  %v1077 = vpop.xlane.xlu0 %1076
  %v1078 = vsel %vm816, %v992, 0.0
  %1079 = vadd.xlane.f32.xlu0 %v1078
  %v1080 = vpop.xlane.xlu0 %1079
  %v1081 = vsel %vm816, %v994, 0.0
  %1082 = vadd.xlane.f32.xlu0 %v1081
  %v1083 = vpop.xlane.xlu0 %1082
  %v1084 = vsel %vm816, %v996, 0.0
  %1085 = vadd.xlane.f32.xlu0 %v1084
  %v1086 = vpop.xlane.xlu0 %1085
  %v1087 = vsel %vm816, %v998, 0.0
  %1088 = vadd.xlane.f32.xlu0 %v1087
  %v1089 = vpop.xlane.xlu0 %1088
  %v1090 = vsel %vm816, %v1000, 0.0
  %1091 = vadd.xlane.f32.xlu0 %v1090
  %v1092 = vpop.xlane.xlu0 %1091
  %v1093 = vsel %vm816, %v1002, 0.0
  %1094 = vadd.xlane.f32.xlu0 %v1093
  %v1095 = vpop.xlane.xlu0 %1094
  %v1096 = vsel %vm816, %v1004, 0.0
  %1097 = vadd.xlane.f32.xlu0 %v1096
  %v1098 = vpop.xlane.xlu0 %1097
  %v1099 = vsel %vm816, %v1006, 0.0
  %1100 = vadd.xlane.f32.xlu0 %v1099
  %v1101 = vpop.xlane.xlu0 %1100
  %v1102 = vsel %vm816, %v1008, 0.0
  %1103 = vadd.xlane.f32.xlu0 %v1102
  %v1104 = vpop.xlane.xlu0 %1103
  %v1105 = vpack.c.bf16 %v946, %v946
  %v1106 = vpack.c.bf16 %v948, %v948
  %v1107 = vpack.c.bf16 %v950, %v950
  %v1108 = vpack.c.bf16 %v952, %v952
  %v1109 = vpack.c.bf16 %v954, %v954
  %v1110 = vpack.c.bf16 %v956, %v956
  %v1111 = vpack.c.bf16 %v958, %v958
  %v1112 = vpack.c.bf16 %v960, %v960
  %v1113 = vpack.c.bf16 %v962, %v962
  %v1114 = vpack.c.bf16 %v964, %v964
  %v1115 = vpack.c.bf16 %v966, %v966
  %v1116 = vpack.c.bf16 %v968, %v968
  %v1117 = vpack.c.bf16 %v970, %v970
  %v1118 = vpack.c.bf16 %v972, %v972
  %v1119 = vpack.c.bf16 %v974, %v974
  %v1120 = vpack.c.bf16 %v976, %v976
  %v1121 = vpack.c.bf16 %v978, %v978
  %v1122 = vpack.c.bf16 %v980, %v980
  %v1123 = vpack.c.bf16 %v982, %v982
  %v1124 = vpack.c.bf16 %v984, %v984
  %v1125 = vpack.c.bf16 %v986, %v986
  %v1126 = vpack.c.bf16 %v988, %v988
  %v1127 = vpack.c.bf16 %v990, %v990
  %v1128 = vpack.c.bf16 %v992, %v992
  %v1129 = vpack.c.bf16 %v994, %v994
  %v1130 = vpack.c.bf16 %v996, %v996
  %v1131 = vpack.c.bf16 %v998, %v998
  %v1132 = vpack.c.bf16 %v1000, %v1000
  %v1133 = vpack.c.bf16 %v1002, %v1002
  %v1134 = vpack.c.bf16 %v1004, %v1004
  %v1135 = vpack.c.bf16 %v1006, %v1006
  %v1136 = vpack.c.bf16 %v1008, %v1008
  %v1139 = vunpack.c.l.b16 %v1105
  %v1140 = vunpack.c.l.b16 %v1106
  %v1141 = vpack.c.b16 %v1140, %v1139
  %v1146 = vunpack.c.l.b16 %v111
  %v1147 = vunpack.c.l.b16 %v112
  %v1148 = vunpack.c.l.b16 %v113
  %v1149 = vunpack.c.l.b16 %v114
  %v1150 = vpack.c.b16 %v1147, %v1146
  %v1151 = vpack.c.b16 %v1149, %v1148
  %v1155 = vsel %vm816, %v1141, 0
  %1157 = vmatpush.bf16.msra.mxu0 0
  %1158 = vmatpush.bf16.msra.mxu0 0
  %1159 = vmatpush.bf16.msra.mxu0 0
  %1160 = vmatpush.bf16.msra.mxu0 0
  %1161 = vmatpush.bf16.msra.mxu0 0
  %1162 = vmatpush.bf16.msra.mxu0 0
  %1163 = vmatpush.bf16.msra.mxu0 %v1151
  %1164 = vmatpush.bf16.msra.mxu0 %v1150
  %1165 = vmatmul.bf16.gmra.mxu0 %v1155
  %v1166 = vpop.f32.mrf.mxu0
  %v1167 = vadd.f32 0.0, %v1166
  %v1168 = vpop.f32.mrf.mxu0
  %v1169 = vadd.f32 0.0, %v1168
  %1170 = vdwg.mxu0
  %v1173 = vunpack.c.l.b16 %v1107
  %v1174 = vunpack.c.l.b16 %v1108
  %v1175 = vpack.c.b16 %v1174, %v1173
  %v1180 = vunpack.c.l.b16 %v115
  %v1181 = vunpack.c.l.b16 %v116
  %v1182 = vunpack.c.l.b16 %v117
  %v1183 = vunpack.c.l.b16 %v118
  %v1184 = vpack.c.b16 %v1181, %v1180
  %v1185 = vpack.c.b16 %v1183, %v1182
  %v1189 = vsel %vm816, %v1175, 0
  %1191 = vmatpush.bf16.msra.mxu0 0
  %1192 = vmatpush.bf16.msra.mxu0 0
  %1193 = vmatpush.bf16.msra.mxu0 0
  %1194 = vmatpush.bf16.msra.mxu0 0
  %1195 = vmatpush.bf16.msra.mxu0 0
  %1196 = vmatpush.bf16.msra.mxu0 0
  %1197 = vmatpush.bf16.msra.mxu0 %v1185
  %1198 = vmatpush.bf16.msra.mxu0 %v1184
  %1199 = vmatmul.bf16.gmra.mxu0 %v1189
  %v1200 = vpop.f32.mrf.mxu0
  %v1201 = vadd.f32 0.0, %v1200
  %v1202 = vpop.f32.mrf.mxu0
  %v1203 = vadd.f32 0.0, %v1202
  %1204 = vdwg.mxu0
  %v1207 = vunpack.c.l.b16 %v1109
  %v1208 = vunpack.c.l.b16 %v1110
  %v1209 = vpack.c.b16 %v1208, %v1207
  %v1214 = vunpack.c.l.b16 %v119
  %v1215 = vunpack.c.l.b16 %v120
  %v1216 = vunpack.c.l.b16 %v121
  %v1217 = vunpack.c.l.b16 %v122
  %v1218 = vpack.c.b16 %v1215, %v1214
  %v1219 = vpack.c.b16 %v1217, %v1216
  %v1223 = vsel %vm816, %v1209, 0
  %1225 = vmatpush.bf16.msra.mxu0 0
  %1226 = vmatpush.bf16.msra.mxu0 0
  %1227 = vmatpush.bf16.msra.mxu0 0
  %1228 = vmatpush.bf16.msra.mxu0 0
  %1229 = vmatpush.bf16.msra.mxu0 0
  %1230 = vmatpush.bf16.msra.mxu0 0
  %1231 = vmatpush.bf16.msra.mxu0 %v1219
  %1232 = vmatpush.bf16.msra.mxu0 %v1218
  %1233 = vmatmul.bf16.gmra.mxu0 %v1223
  %v1234 = vpop.f32.mrf.mxu0
  %v1235 = vadd.f32 0.0, %v1234
  %v1236 = vpop.f32.mrf.mxu0
  %v1237 = vadd.f32 0.0, %v1236
  %1238 = vdwg.mxu0
  %v1241 = vunpack.c.l.b16 %v1111
  %v1242 = vunpack.c.l.b16 %v1112
  %v1243 = vpack.c.b16 %v1242, %v1241
  %v1248 = vunpack.c.l.b16 %v123
  %v1249 = vunpack.c.l.b16 %v124
  %v1250 = vunpack.c.l.b16 %v125
  %v1251 = vunpack.c.l.b16 %v126
  %v1252 = vpack.c.b16 %v1249, %v1248
  %v1253 = vpack.c.b16 %v1251, %v1250
  %v1257 = vsel %vm816, %v1243, 0
  %1259 = vmatpush.bf16.msra.mxu0 0
  %1260 = vmatpush.bf16.msra.mxu0 0
  %1261 = vmatpush.bf16.msra.mxu0 0
  %1262 = vmatpush.bf16.msra.mxu0 0
  %1263 = vmatpush.bf16.msra.mxu0 0
  %1264 = vmatpush.bf16.msra.mxu0 0
  %1265 = vmatpush.bf16.msra.mxu0 %v1253
  %1266 = vmatpush.bf16.msra.mxu0 %v1252
  %1267 = vmatmul.bf16.gmra.mxu0 %v1257
  %v1268 = vpop.f32.mrf.mxu0
  %v1269 = vadd.f32 0.0, %v1268
  %v1270 = vpop.f32.mrf.mxu0
  %v1271 = vadd.f32 0.0, %v1270
  %1272 = vdwg.mxu0
  %v1275 = vunpack.c.l.b16 %v1113
  %v1276 = vunpack.c.l.b16 %v1114
  %v1277 = vpack.c.b16 %v1276, %v1275
  %v1282 = vunpack.c.l.b16 %v127
  %v1283 = vunpack.c.l.b16 %v128
  %v1284 = vunpack.c.l.b16 %v129
  %v1285 = vunpack.c.l.b16 %v130
  %v1286 = vpack.c.b16 %v1283, %v1282
  %v1287 = vpack.c.b16 %v1285, %v1284
  %v1291 = vsel %vm816, %v1277, 0
  %1293 = vmatpush.bf16.msra.mxu0 0
  %1294 = vmatpush.bf16.msra.mxu0 0
  %1295 = vmatpush.bf16.msra.mxu0 0
  %1296 = vmatpush.bf16.msra.mxu0 0
  %1297 = vmatpush.bf16.msra.mxu0 0
  %1298 = vmatpush.bf16.msra.mxu0 0
  %1299 = vmatpush.bf16.msra.mxu0 %v1287
  %1300 = vmatpush.bf16.msra.mxu0 %v1286
  %1301 = vmatmul.bf16.gmra.mxu0 %v1291
  %v1302 = vpop.f32.mrf.mxu0
  %v1303 = vadd.f32 0.0, %v1302
  %v1304 = vpop.f32.mrf.mxu0
  %v1305 = vadd.f32 0.0, %v1304
  %1306 = vdwg.mxu0
  %v1309 = vunpack.c.l.b16 %v1115
  %v1310 = vunpack.c.l.b16 %v1116
  %v1311 = vpack.c.b16 %v1310, %v1309
  %v1316 = vunpack.c.l.b16 %v131
  %v1317 = vunpack.c.l.b16 %v132
  %v1318 = vunpack.c.l.b16 %v133
  %v1319 = vunpack.c.l.b16 %v134
  %v1320 = vpack.c.b16 %v1317, %v1316
  %v1321 = vpack.c.b16 %v1319, %v1318
  %v1325 = vsel %vm816, %v1311, 0
  %1327 = vmatpush.bf16.msra.mxu0 0
  %1328 = vmatpush.bf16.msra.mxu0 0
  %1329 = vmatpush.bf16.msra.mxu0 0
  %1330 = vmatpush.bf16.msra.mxu0 0
  %1331 = vmatpush.bf16.msra.mxu0 0
  %1332 = vmatpush.bf16.msra.mxu0 0
  %1333 = vmatpush.bf16.msra.mxu0 %v1321
  %1334 = vmatpush.bf16.msra.mxu0 %v1320
  %1335 = vmatmul.bf16.gmra.mxu0 %v1325
  %v1336 = vpop.f32.mrf.mxu0
  %v1337 = vadd.f32 0.0, %v1336
  %v1338 = vpop.f32.mrf.mxu0
  %v1339 = vadd.f32 0.0, %v1338
  %1340 = vdwg.mxu0
  %v1343 = vunpack.c.l.b16 %v1117
  %v1344 = vunpack.c.l.b16 %v1118
  %v1345 = vpack.c.b16 %v1344, %v1343
  %v1350 = vunpack.c.l.b16 %v135
  %v1351 = vunpack.c.l.b16 %v136
  %v1352 = vunpack.c.l.b16 %v137
  %v1353 = vunpack.c.l.b16 %v138
  %v1354 = vpack.c.b16 %v1351, %v1350
  %v1355 = vpack.c.b16 %v1353, %v1352
  %v1359 = vsel %vm816, %v1345, 0
  %1361 = vmatpush.bf16.msra.mxu0 0
  %1362 = vmatpush.bf16.msra.mxu0 0
  %1363 = vmatpush.bf16.msra.mxu0 0
  %1364 = vmatpush.bf16.msra.mxu0 0
  %1365 = vmatpush.bf16.msra.mxu0 0
  %1366 = vmatpush.bf16.msra.mxu0 0
  %1367 = vmatpush.bf16.msra.mxu0 %v1355
  %1368 = vmatpush.bf16.msra.mxu0 %v1354
  %1369 = vmatmul.bf16.gmra.mxu0 %v1359
  %v1370 = vpop.f32.mrf.mxu0
  %v1371 = vadd.f32 0.0, %v1370
  %v1372 = vpop.f32.mrf.mxu0
  %v1373 = vadd.f32 0.0, %v1372
  %1374 = vdwg.mxu0
  %v1377 = vunpack.c.l.b16 %v1119
  %v1378 = vunpack.c.l.b16 %v1120
  %v1379 = vpack.c.b16 %v1378, %v1377
  %v1384 = vunpack.c.l.b16 %v139
  %v1385 = vunpack.c.l.b16 %v140
  %v1386 = vunpack.c.l.b16 %v141
  %v1387 = vunpack.c.l.b16 %v142
  %v1388 = vpack.c.b16 %v1385, %v1384
  %v1389 = vpack.c.b16 %v1387, %v1386
  %v1393 = vsel %vm816, %v1379, 0
  %1395 = vmatpush.bf16.msra.mxu0 0
  %1396 = vmatpush.bf16.msra.mxu0 0
  %1397 = vmatpush.bf16.msra.mxu0 0
  %1398 = vmatpush.bf16.msra.mxu0 0
  %1399 = vmatpush.bf16.msra.mxu0 0
  %1400 = vmatpush.bf16.msra.mxu0 0
  %1401 = vmatpush.bf16.msra.mxu0 %v1389
  %1402 = vmatpush.bf16.msra.mxu0 %v1388
  %1403 = vmatmul.bf16.gmra.mxu0 %v1393
  %v1404 = vpop.f32.mrf.mxu0
  %v1405 = vadd.f32 0.0, %v1404
  %v1406 = vpop.f32.mrf.mxu0
  %v1407 = vadd.f32 0.0, %v1406
  %1408 = vdwg.mxu0
  %v1411 = vunpack.c.l.b16 %v1121
  %v1412 = vunpack.c.l.b16 %v1122
  %v1413 = vpack.c.b16 %v1412, %v1411
  %v1418 = vunpack.c.l.b16 %v143
  %v1419 = vunpack.c.l.b16 %v144
  %v1420 = vunpack.c.l.b16 %v145
  %v1421 = vunpack.c.l.b16 %v146
  %v1422 = vpack.c.b16 %v1419, %v1418
  %v1423 = vpack.c.b16 %v1421, %v1420
  %v1427 = vsel %vm816, %v1413, 0
  %1429 = vmatpush.bf16.msra.mxu0 0
  %1430 = vmatpush.bf16.msra.mxu0 0
  %1431 = vmatpush.bf16.msra.mxu0 0
  %1432 = vmatpush.bf16.msra.mxu0 0
  %1433 = vmatpush.bf16.msra.mxu0 0
  %1434 = vmatpush.bf16.msra.mxu0 0
  %1435 = vmatpush.bf16.msra.mxu0 %v1423
  %1436 = vmatpush.bf16.msra.mxu0 %v1422
  %1437 = vmatmul.bf16.gmra.mxu0 %v1427
  %v1438 = vpop.f32.mrf.mxu0
  %v1439 = vadd.f32 0.0, %v1438
  %v1440 = vpop.f32.mrf.mxu0
  %v1441 = vadd.f32 0.0, %v1440
  %1442 = vdwg.mxu0
  %v1445 = vunpack.c.l.b16 %v1123
  %v1446 = vunpack.c.l.b16 %v1124
  %v1447 = vpack.c.b16 %v1446, %v1445
  %v1452 = vunpack.c.l.b16 %v147
  %v1453 = vunpack.c.l.b16 %v148
  %v1454 = vunpack.c.l.b16 %v149
  %v1455 = vunpack.c.l.b16 %v150
  %v1456 = vpack.c.b16 %v1453, %v1452
  %v1457 = vpack.c.b16 %v1455, %v1454
  %v1461 = vsel %vm816, %v1447, 0
  %1463 = vmatpush.bf16.msra.mxu0 0
  %1464 = vmatpush.bf16.msra.mxu0 0
  %1465 = vmatpush.bf16.msra.mxu0 0
  %1466 = vmatpush.bf16.msra.mxu0 0
  %1467 = vmatpush.bf16.msra.mxu0 0
  %1468 = vmatpush.bf16.msra.mxu0 0
  %1469 = vmatpush.bf16.msra.mxu0 %v1457
  %1470 = vmatpush.bf16.msra.mxu0 %v1456
  %1471 = vmatmul.bf16.gmra.mxu0 %v1461
  %v1472 = vpop.f32.mrf.mxu0
  %v1473 = vadd.f32 0.0, %v1472
  %v1474 = vpop.f32.mrf.mxu0
  %v1475 = vadd.f32 0.0, %v1474
  %1476 = vdwg.mxu0
  %v1479 = vunpack.c.l.b16 %v1125
  %v1480 = vunpack.c.l.b16 %v1126
  %v1481 = vpack.c.b16 %v1480, %v1479
  %v1486 = vunpack.c.l.b16 %v151
  %v1487 = vunpack.c.l.b16 %v152
  %v1488 = vunpack.c.l.b16 %v153
  %v1489 = vunpack.c.l.b16 %v154
  %v1490 = vpack.c.b16 %v1487, %v1486
  %v1491 = vpack.c.b16 %v1489, %v1488
  %v1495 = vsel %vm816, %v1481, 0
  %1497 = vmatpush.bf16.msra.mxu0 0
  %1498 = vmatpush.bf16.msra.mxu0 0
  %1499 = vmatpush.bf16.msra.mxu0 0
  %1500 = vmatpush.bf16.msra.mxu0 0
  %1501 = vmatpush.bf16.msra.mxu0 0
  %1502 = vmatpush.bf16.msra.mxu0 0
  %1503 = vmatpush.bf16.msra.mxu0 %v1491
  %1504 = vmatpush.bf16.msra.mxu0 %v1490
  %1505 = vmatmul.bf16.gmra.mxu0 %v1495
  %v1506 = vpop.f32.mrf.mxu0
  %v1507 = vadd.f32 0.0, %v1506
  %v1508 = vpop.f32.mrf.mxu0
  %v1509 = vadd.f32 0.0, %v1508
  %1510 = vdwg.mxu0
  %v1513 = vunpack.c.l.b16 %v1127
  %v1514 = vunpack.c.l.b16 %v1128
  %v1515 = vpack.c.b16 %v1514, %v1513
  %v1520 = vunpack.c.l.b16 %v155
  %v1521 = vunpack.c.l.b16 %v156
  %v1522 = vunpack.c.l.b16 %v157
  %v1523 = vunpack.c.l.b16 %v158
  %v1524 = vpack.c.b16 %v1521, %v1520
  %v1525 = vpack.c.b16 %v1523, %v1522
  %v1529 = vsel %vm816, %v1515, 0
  %1531 = vmatpush.bf16.msra.mxu0 0
  %1532 = vmatpush.bf16.msra.mxu0 0
  %1533 = vmatpush.bf16.msra.mxu0 0
  %1534 = vmatpush.bf16.msra.mxu0 0
  %1535 = vmatpush.bf16.msra.mxu0 0
  %1536 = vmatpush.bf16.msra.mxu0 0
  %1537 = vmatpush.bf16.msra.mxu0 %v1525
  %1538 = vmatpush.bf16.msra.mxu0 %v1524
  %1539 = vmatmul.bf16.gmra.mxu0 %v1529
  %v1540 = vpop.f32.mrf.mxu0
  %v1541 = vadd.f32 0.0, %v1540
  %v1542 = vpop.f32.mrf.mxu0
  %v1543 = vadd.f32 0.0, %v1542
  %1544 = vdwg.mxu0
  %v1547 = vunpack.c.l.b16 %v1129
  %v1548 = vunpack.c.l.b16 %v1130
  %v1549 = vpack.c.b16 %v1548, %v1547
  %v1554 = vunpack.c.l.b16 %v159
  %v1555 = vunpack.c.l.b16 %v160
  %v1556 = vunpack.c.l.b16 %v161
  %v1557 = vunpack.c.l.b16 %v162
  %v1558 = vpack.c.b16 %v1555, %v1554
  %v1559 = vpack.c.b16 %v1557, %v1556
  %v1563 = vsel %vm816, %v1549, 0
  %1565 = vmatpush.bf16.msra.mxu0 0
  %1566 = vmatpush.bf16.msra.mxu0 0
  %1567 = vmatpush.bf16.msra.mxu0 0
  %1568 = vmatpush.bf16.msra.mxu0 0
  %1569 = vmatpush.bf16.msra.mxu0 0
  %1570 = vmatpush.bf16.msra.mxu0 0
  %1571 = vmatpush.bf16.msra.mxu0 %v1559
  %1572 = vmatpush.bf16.msra.mxu0 %v1558
  %1573 = vmatmul.bf16.gmra.mxu0 %v1563
  %v1574 = vpop.f32.mrf.mxu0
  %v1575 = vadd.f32 0.0, %v1574
  %v1576 = vpop.f32.mrf.mxu0
  %v1577 = vadd.f32 0.0, %v1576
  %1578 = vdwg.mxu0
  %v1581 = vunpack.c.l.b16 %v1131
  %v1582 = vunpack.c.l.b16 %v1132
  %v1583 = vpack.c.b16 %v1582, %v1581
  %v1588 = vunpack.c.l.b16 %v163
  %v1589 = vunpack.c.l.b16 %v164
  %v1590 = vunpack.c.l.b16 %v165
  %v1591 = vunpack.c.l.b16 %v166
  %v1592 = vpack.c.b16 %v1589, %v1588
  %v1593 = vpack.c.b16 %v1591, %v1590
  %v1597 = vsel %vm816, %v1583, 0
  %1599 = vmatpush.bf16.msra.mxu0 0
  %1600 = vmatpush.bf16.msra.mxu0 0
  %1601 = vmatpush.bf16.msra.mxu0 0
  %1602 = vmatpush.bf16.msra.mxu0 0
  %1603 = vmatpush.bf16.msra.mxu0 0
  %1604 = vmatpush.bf16.msra.mxu0 0
  %1605 = vmatpush.bf16.msra.mxu0 %v1593
  %1606 = vmatpush.bf16.msra.mxu0 %v1592
  %1607 = vmatmul.bf16.gmra.mxu0 %v1597
  %v1608 = vpop.f32.mrf.mxu0
  %v1609 = vadd.f32 0.0, %v1608
  %v1610 = vpop.f32.mrf.mxu0
  %v1611 = vadd.f32 0.0, %v1610
  %1612 = vdwg.mxu0
  %v1615 = vunpack.c.l.b16 %v1133
  %v1616 = vunpack.c.l.b16 %v1134
  %v1617 = vpack.c.b16 %v1616, %v1615
  %v1622 = vunpack.c.l.b16 %v167
  %v1623 = vunpack.c.l.b16 %v168
  %v1624 = vunpack.c.l.b16 %v169
  %v1625 = vunpack.c.l.b16 %v170
  %v1626 = vpack.c.b16 %v1623, %v1622
  %v1627 = vpack.c.b16 %v1625, %v1624
  %v1631 = vsel %vm816, %v1617, 0
  %1633 = vmatpush.bf16.msra.mxu0 0
  %1634 = vmatpush.bf16.msra.mxu0 0
  %1635 = vmatpush.bf16.msra.mxu0 0
  %1636 = vmatpush.bf16.msra.mxu0 0
  %1637 = vmatpush.bf16.msra.mxu0 0
  %1638 = vmatpush.bf16.msra.mxu0 0
  %1639 = vmatpush.bf16.msra.mxu0 %v1627
  %1640 = vmatpush.bf16.msra.mxu0 %v1626
  %1641 = vmatmul.bf16.gmra.mxu0 %v1631
  %v1642 = vpop.f32.mrf.mxu0
  %v1643 = vadd.f32 0.0, %v1642
  %v1644 = vpop.f32.mrf.mxu0
  %v1645 = vadd.f32 0.0, %v1644
  %1646 = vdwg.mxu0
  %v1649 = vunpack.c.l.b16 %v1135
  %v1650 = vunpack.c.l.b16 %v1136
  %v1651 = vpack.c.b16 %v1650, %v1649
  %v1656 = vunpack.c.l.b16 %v171
  %v1657 = vunpack.c.l.b16 %v172
  %v1658 = vunpack.c.l.b16 %v173
  %v1659 = vunpack.c.l.b16 %v174
  %v1660 = vpack.c.b16 %v1657, %v1656
  %v1661 = vpack.c.b16 %v1659, %v1658
  %v1665 = vsel %vm816, %v1651, 0
  %1667 = vmatpush.bf16.msra.mxu0 0
  %1668 = vmatpush.bf16.msra.mxu0 0
  %1669 = vmatpush.bf16.msra.mxu0 0
  %1670 = vmatpush.bf16.msra.mxu0 0
  %1671 = vmatpush.bf16.msra.mxu0 0
  %1672 = vmatpush.bf16.msra.mxu0 0
  %1673 = vmatpush.bf16.msra.mxu0 %v1661
  %1674 = vmatpush.bf16.msra.mxu0 %v1660
  %1675 = vmatmul.bf16.gmra.mxu0 %v1665
  %v1676 = vpop.f32.mrf.mxu0
  %v1677 = vadd.f32 0.0, %v1676
  %v1678 = vpop.f32.mrf.mxu0
  %v1679 = vadd.f32 0.0, %v1678
  %1680 = vdwg.mxu0
  %v1681 = vrcp.pop %v1011
  %v1682 = vrcp.pop %v1014
  %v1683 = vrcp.pop %v1017
  %v1684 = vrcp.pop %v1020
  %v1685 = vrcp.pop %v1023
  %v1686 = vrcp.pop %v1026
  %v1687 = vrcp.pop %v1029
  %v1688 = vrcp.pop %v1032
  %v1689 = vrcp.pop %v1035
  %v1690 = vrcp.pop %v1038
  %v1691 = vrcp.pop %v1041
  %v1692 = vrcp.pop %v1044
  %v1693 = vrcp.pop %v1047
  %v1694 = vrcp.pop %v1050
  %v1695 = vrcp.pop %v1053
  %v1696 = vrcp.pop %v1056
  %v1697 = vrcp.pop %v1059
  %v1698 = vrcp.pop %v1062
  %v1699 = vrcp.pop %v1065
  %v1700 = vrcp.pop %v1068
  %v1701 = vrcp.pop %v1071
  %v1702 = vrcp.pop %v1074
  %v1703 = vrcp.pop %v1077
  %v1704 = vrcp.pop %v1080
  %v1705 = vrcp.pop %v1083
  %v1706 = vrcp.pop %v1086
  %v1707 = vrcp.pop %v1089
  %v1708 = vrcp.pop %v1092
  %v1709 = vrcp.pop %v1095
  %v1710 = vrcp.pop %v1098
  %v1711 = vrcp.pop %v1101
  %v1712 = vrcp.pop %v1104
  %v1713 = vmul.f32 %v1167, %v1681
  %v1714 = vmul.f32 %v1169, %v1682
  %v1715 = vmul.f32 %v1201, %v1683
  %v1716 = vmul.f32 %v1203, %v1684
  %v1717 = vmul.f32 %v1235, %v1685
  %v1718 = vmul.f32 %v1237, %v1686
  %v1719 = vmul.f32 %v1269, %v1687
  %v1720 = vmul.f32 %v1271, %v1688
  %v1721 = vmul.f32 %v1303, %v1689
  %v1722 = vmul.f32 %v1305, %v1690
  %v1723 = vmul.f32 %v1337, %v1691
  %v1724 = vmul.f32 %v1339, %v1692
  %v1725 = vmul.f32 %v1371, %v1693
  %v1726 = vmul.f32 %v1373, %v1694
  %v1727 = vmul.f32 %v1405, %v1695
  %v1728 = vmul.f32 %v1407, %v1696
  %v1729 = vmul.f32 %v1439, %v1697
  %v1730 = vmul.f32 %v1441, %v1698
  %v1731 = vmul.f32 %v1473, %v1699
  %v1732 = vmul.f32 %v1475, %v1700
  %v1733 = vmul.f32 %v1507, %v1701
  %v1734 = vmul.f32 %v1509, %v1702
  %v1735 = vmul.f32 %v1541, %v1703
  %v1736 = vmul.f32 %v1543, %v1704
  %v1737 = vmul.f32 %v1575, %v1705
  %v1738 = vmul.f32 %v1577, %v1706
  %v1739 = vmul.f32 %v1609, %v1707
  %v1740 = vmul.f32 %v1611, %v1708
  %v1741 = vmul.f32 %v1643, %v1709
  %v1742 = vmul.f32 %v1645, %v1710
  %v1743 = vmul.f32 %v1677, %v1711
  %v1744 = vmul.f32 %v1679, %v1712
  %1745 = vst.msk [vmem:[%s3] sm:$0xff] %vm190, %v1713
  %1746 = vst.msk [vmem:[%s3 + $0x8] sm:$0xff] %vm190, %v1714
  %1747 = vst.msk [vmem:[%s3 + $0x10] sm:$0xff] %vm190, %v1715
  %1748 = vst.msk [vmem:[%s3 + $0x18] sm:$0xff] %vm190, %v1716
  %1749 = vst.msk [vmem:[%s3 + $0x20] sm:$0xff] %vm190, %v1717
  %1750 = vst.msk [vmem:[%s3 + $0x28] sm:$0xff] %vm190, %v1718
  %1751 = vst.msk [vmem:[%s3 + $0x30] sm:$0xff] %vm190, %v1719
  %1752 = vst.msk [vmem:[%s3 + $0x38] sm:$0xff] %vm190, %v1720
  %1753 = vst.msk [vmem:[%s3 + $0x40] sm:$0xff] %vm190, %v1721
  %1754 = vst.msk [vmem:[%s3 + $0x48] sm:$0xff] %vm190, %v1722
  %1755 = vst.msk [vmem:[%s3 + $0x50] sm:$0xff] %vm190, %v1723
  %1756 = vst.msk [vmem:[%s3 + $0x58] sm:$0xff] %vm190, %v1724
  %1757 = vst.msk [vmem:[%s3 + $0x60] sm:$0xff] %vm190, %v1725
  %1758 = vst.msk [vmem:[%s3 + $0x68] sm:$0xff] %vm190, %v1726
  %1759 = vst.msk [vmem:[%s3 + $0x70] sm:$0xff] %vm190, %v1727
  %1760 = vst.msk [vmem:[%s3 + $0x78] sm:$0xff] %vm190, %v1728
  %1761 = vst.msk [vmem:[%s3 + $0x80] sm:$0xff] %vm190, %v1729
  %1762 = vst.msk [vmem:[%s3 + $0x88] sm:$0xff] %vm190, %v1730
  %1763 = vst.msk [vmem:[%s3 + $0x90] sm:$0xff] %vm190, %v1731
  %1764 = vst.msk [vmem:[%s3 + $0x98] sm:$0xff] %vm190, %v1732
  %1765 = vst.msk [vmem:[%s3 + $0xa0] sm:$0xff] %vm190, %v1733
  %1766 = vst.msk [vmem:[%s3 + $0xa8] sm:$0xff] %vm190, %v1734
  %1767 = vst.msk [vmem:[%s3 + $0xb0] sm:$0xff] %vm190, %v1735
  %1768 = vst.msk [vmem:[%s3 + $0xb8] sm:$0xff] %vm190, %v1736
  %1769 = vst.msk [vmem:[%s3 + $0xc0] sm:$0xff] %vm190, %v1737
  %1770 = vst.msk [vmem:[%s3 + $0xc8] sm:$0xff] %vm190, %v1738
  %1771 = vst.msk [vmem:[%s3 + $0xd0] sm:$0xff] %vm190, %v1739
  %1772 = vst.msk [vmem:[%s3 + $0xd8] sm:$0xff] %vm190, %v1740
  %1773 = vst.msk [vmem:[%s3 + $0xe0] sm:$0xff] %vm190, %v1741
  %1774 = vst.msk [vmem:[%s3 + $0xe8] sm:$0xff] %vm190, %v1742
  %1775 = vst.msk [vmem:[%s3 + $0xf0] sm:$0xff] %vm190, %v1743
  %1776 = vst.msk [vmem:[%s3 + $0xf8] sm:$0xff] %vm190, %v1744
  // Predicated region
  $region14: #{bilevel_routing_attention_nchw.5} parent=0 // pred_check
    _
  $region15: #{bilevel_routing_attention_nchw.5} parent=0 // pred_check_branch
    %1778 = sbr.rel (0) target = $region17
  $region16: #{bilevel_routing_attention_nchw.5} parent=0 // pred_region
    _
  $region17: #{bilevel_routing_attention_nchw.5} parent=0 // pred_fallthru
    _
  // Predicated region
  $region18: #{bilevel_routing_attention_nchw.5} parent=0 // pred_check
    _
  $region19: #{bilevel_routing_attention_nchw.5} parent=0 // pred_check_branch
    %1780 = sbr.rel (0) target = $region21
  $region20: #{bilevel_routing_attention_nchw.5} parent=0 // pred_region
    _
  $region21: #{bilevel_routing_attention_nchw.5} parent=0 // pred_fallthru
    _

// kernel: bilevel_routing_attention_nchw.7
$region0: #{bilevel_routing_attention_nchw.7}
  #allocation0 [shape = 'u32[]', space=smem, size = 0x4, offset = 0x4, fixed_abs, tag = 'smem constant byte address 0x4 - core index']
  #allocation1 [shape = 'u32[72,128]{1,0:T(1,128)}', space=vmem, size = 0x9000, scoped, tag = 'internal scratch']
  %s0 = inlined_call_operand.vmem [shape: f32[128,8], index: 0, kind: input, shape index: {}]
  %s1 = inlined_call_operand.vmem [shape: f32[128,8], index: 1, kind: input, shape index: {}]
  %s2 = inlined_call_operand.vmem [shape: f32[8,8], index: 2, kind: input, shape index: {}]
  %s3 = inlined_call_operand.vmem [shape: f32[1,8], index: 3, kind: input, shape index: {}]
  %s4 = inlined_call_operand.vmem [shape: f32[128,8], index: 4, kind: output, shape index: {}]
  %s5 = sld [smem:[#allocation0]]
  $region26: #{bilevel_routing_attention_nchw.7} parent=0
    _
  %s7 = ssub.s32 1, %s5
  %s8 = scalar_select 0, %s7, %s5
  // Predicated region
  $region2: #{bilevel_routing_attention_nchw.7} parent=0 // pred_check
    _
  $region3: #{bilevel_routing_attention_nchw.7} parent=0 // pred_check_branch
    %10 = sbr.rel (0) target = $region5
  $region4: #{bilevel_routing_attention_nchw.7} parent=0 // pred_region
    _
  $region5: #{bilevel_routing_attention_nchw.7} parent=0 // pred_fallthru
    _
  // Predicated region
  $region6: #{bilevel_routing_attention_nchw.7} parent=0 // pred_check
    _
  $region7: #{bilevel_routing_attention_nchw.7} parent=0 // pred_check_branch
    %12 = sbr.rel (0) target = $region9
  $region8: #{bilevel_routing_attention_nchw.7} parent=0 // pred_region
    _
  $region9: #{bilevel_routing_attention_nchw.7} parent=0 // pred_fallthru
    _
  // Predicated region
  $region10: #{bilevel_routing_attention_nchw.7} parent=0 // pred_check
    _
  $region11: #{bilevel_routing_attention_nchw.7} parent=0 // pred_check_branch
    %14 = sbr.rel (0) target = $region13
  $region12: #{bilevel_routing_attention_nchw.7} parent=0 // pred_region
    _
  $region13: #{bilevel_routing_attention_nchw.7} parent=0 // pred_fallthru
    _
  // Predicated region
  $region14: #{bilevel_routing_attention_nchw.7} parent=0 // pred_check
    _
  $region15: #{bilevel_routing_attention_nchw.7} parent=0 // pred_check_branch
    %16 = sbr.rel (0) target = $region17
  $region16: #{bilevel_routing_attention_nchw.7} parent=0 // pred_region
    _
  $region17: #{bilevel_routing_attention_nchw.7} parent=0 // pred_fallthru
    _
  %v17 = vld [vmem:[%s0] sm:$0xff]
  %v18 = vld [vmem:[%s0 + $0x8] sm:$0xff]
  %v19 = vld [vmem:[%s0 + $0x10] sm:$0xff]
  %v20 = vld [vmem:[%s0 + $0x18] sm:$0xff]
  %v21 = vld [vmem:[%s0 + $0x20] sm:$0xff]
  %v22 = vld [vmem:[%s0 + $0x28] sm:$0xff]
  %v23 = vld [vmem:[%s0 + $0x30] sm:$0xff]
  %v24 = vld [vmem:[%s0 + $0x38] sm:$0xff]
  %v25 = vld [vmem:[%s0 + $0x40] sm:$0xff]
  %v26 = vld [vmem:[%s0 + $0x48] sm:$0xff]
  %v27 = vld [vmem:[%s0 + $0x50] sm:$0xff]
  %v28 = vld [vmem:[%s0 + $0x58] sm:$0xff]
  %v29 = vld [vmem:[%s0 + $0x60] sm:$0xff]
  %v30 = vld [vmem:[%s0 + $0x68] sm:$0xff]
  %v31 = vld [vmem:[%s0 + $0x70] sm:$0xff]
  %v32 = vld [vmem:[%s0 + $0x78] sm:$0xff]
  %v33 = vld [vmem:[%s1] sm:$0xff]
  %v34 = vld [vmem:[%s1 + $0x8] sm:$0xff]
  %v35 = vld [vmem:[%s1 + $0x10] sm:$0xff]
  %v36 = vld [vmem:[%s1 + $0x18] sm:$0xff]
  %v37 = vld [vmem:[%s1 + $0x20] sm:$0xff]
  %v38 = vld [vmem:[%s1 + $0x28] sm:$0xff]
  %v39 = vld [vmem:[%s1 + $0x30] sm:$0xff]
  %v40 = vld [vmem:[%s1 + $0x38] sm:$0xff]
  %v41 = vld [vmem:[%s1 + $0x40] sm:$0xff]
  %v42 = vld [vmem:[%s1 + $0x48] sm:$0xff]
  %v43 = vld [vmem:[%s1 + $0x50] sm:$0xff]
  %v44 = vld [vmem:[%s1 + $0x58] sm:$0xff]
  %v45 = vld [vmem:[%s1 + $0x60] sm:$0xff]
  %v46 = vld [vmem:[%s1 + $0x68] sm:$0xff]
  %v47 = vld [vmem:[%s1 + $0x70] sm:$0xff]
  %v48 = vld [vmem:[%s1 + $0x78] sm:$0xff]
  %v49 = vadd.f32 %v17, %v33
  %v50 = vadd.f32 %v18, %v34
  %v51 = vadd.f32 %v19, %v35
  %v52 = vadd.f32 %v20, %v36
  %v53 = vadd.f32 %v21, %v37
  %v54 = vadd.f32 %v22, %v38
  %v55 = vadd.f32 %v23, %v39
  %v56 = vadd.f32 %v24, %v40
  %v57 = vadd.f32 %v25, %v41
  %v58 = vadd.f32 %v26, %v42
  %v59 = vadd.f32 %v27, %v43
  %v60 = vadd.f32 %v28, %v44
  %v61 = vadd.f32 %v29, %v45
  %v62 = vadd.f32 %v30, %v46
  %v63 = vadd.f32 %v31, %v47
  %v64 = vadd.f32 %v32, %v48
  %v65 = vld [vmem:[%s2] sm:$0xff]
  %v66 = vld [vmem:[%s3] sm:$0x1]
  %v68 = vperm.slane %v66, 0
  %vm70 = vcmask 64512
  %v72 = vsel %vm70, %v49, 0
  %v75 = vsel %vm70, %v50, 0
  %v78 = vsel %vm70, %v51, 0
  %v81 = vsel %vm70, %v52, 0
  %v84 = vsel %vm70, %v53, 0
  %v87 = vsel %vm70, %v54, 0
  %v90 = vsel %vm70, %v55, 0
  %v93 = vsel %vm70, %v56, 0
  %v96 = vsel %vm70, %v57, 0
  %v99 = vsel %vm70, %v58, 0
  %v102 = vsel %vm70, %v59, 0
  %v105 = vsel %vm70, %v60, 0
  %v108 = vsel %vm70, %v61, 0
  %v111 = vsel %vm70, %v62, 0
  %v114 = vsel %vm70, %v63, 0
  %v117 = vsel %vm70, %v64, 0
  %119 = vmatpush.msra.mxu0 0.0
  %120 = vmatpush.msra.mxu0 0.0
  %121 = vmatpush.msra.mxu0 0.0
  %122 = vmatpush.msra.mxu0 0.0
  %123 = vmatpush.msra.mxu0 0.0
  %124 = vmatpush.msra.mxu0 0.0
  %125 = vmatpush.msra.mxu0 0.0
  %126 = vmatpush.msra.mxu0 0.0
  %127 = vmatpush.msra.mxu0 0.0
  %128 = vmatpush.msra.mxu0 0.0
  %129 = vmatpush.msra.mxu0 0.0
  %130 = vmatpush.msra.mxu0 0.0
  %131 = vmatpush.msra.mxu0 0.0
  %132 = vmatpush.msra.mxu0 0.0
  %133 = vmatpush.msra.mxu0 0.0
  %134 = vmatpush.msra.mxu0 %v65
  %135 = vmatmul.f32.gmra.mxu0 %v72
  %v136 = vpop.f32.mrf.mxu0
  %v137 = vadd.f32 %v68, %v136
  %138 = vmatmul.f32.gmra.mxu0 %v75
  %v139 = vpop.f32.mrf.mxu0
  %v140 = vadd.f32 %v68, %v139
  %141 = vmatmul.f32.gmra.mxu0 %v78
  %v142 = vpop.f32.mrf.mxu0
  %v143 = vadd.f32 %v68, %v142
  %144 = vmatmul.f32.gmra.mxu0 %v81
  %v145 = vpop.f32.mrf.mxu0
  %v146 = vadd.f32 %v68, %v145
  %147 = vmatmul.f32.gmra.mxu0 %v84
  %v148 = vpop.f32.mrf.mxu0
  %v149 = vadd.f32 %v68, %v148
  %150 = vmatmul.f32.gmra.mxu0 %v87
  %v151 = vpop.f32.mrf.mxu0
  %v152 = vadd.f32 %v68, %v151
  %153 = vmatmul.f32.gmra.mxu0 %v90
  %v154 = vpop.f32.mrf.mxu0
  %v155 = vadd.f32 %v68, %v154
  %156 = vmatmul.f32.gmra.mxu0 %v93
  %v157 = vpop.f32.mrf.mxu0
  %v158 = vadd.f32 %v68, %v157
  %159 = vmatmul.f32.gmra.mxu0 %v96
  %v160 = vpop.f32.mrf.mxu0
  %v161 = vadd.f32 %v68, %v160
  %162 = vmatmul.f32.gmra.mxu0 %v99
  %v163 = vpop.f32.mrf.mxu0
  %v164 = vadd.f32 %v68, %v163
  %165 = vmatmul.f32.gmra.mxu0 %v102
  %v166 = vpop.f32.mrf.mxu0
  %v167 = vadd.f32 %v68, %v166
  %168 = vmatmul.f32.gmra.mxu0 %v105
  %v169 = vpop.f32.mrf.mxu0
  %v170 = vadd.f32 %v68, %v169
  %171 = vmatmul.f32.gmra.mxu0 %v108
  %v172 = vpop.f32.mrf.mxu0
  %v173 = vadd.f32 %v68, %v172
  %174 = vmatmul.f32.gmra.mxu0 %v111
  %v175 = vpop.f32.mrf.mxu0
  %v176 = vadd.f32 %v68, %v175
  %177 = vmatmul.f32.gmra.mxu0 %v114
  %v178 = vpop.f32.mrf.mxu0
  %v179 = vadd.f32 %v68, %v178
  %180 = vmatmul.f32.gmra.mxu0 %v117
  %v181 = vpop.f32.mrf.mxu0
  %v182 = vadd.f32 %v68, %v181
  %183 = vdwg.mxu0
  %184 = vst.msk [vmem:[%s4] sm:$0xff] %vm70, %v137
  %185 = vst.msk [vmem:[%s4 + $0x8] sm:$0xff] %vm70, %v140
  %186 = vst.msk [vmem:[%s4 + $0x10] sm:$0xff] %vm70, %v143
  %187 = vst.msk [vmem:[%s4 + $0x18] sm:$0xff] %vm70, %v146
  %188 = vst.msk [vmem:[%s4 + $0x20] sm:$0xff] %vm70, %v149
  %189 = vst.msk [vmem:[%s4 + $0x28] sm:$0xff] %vm70, %v152
  %190 = vst.msk [vmem:[%s4 + $0x30] sm:$0xff] %vm70, %v155
  %191 = vst.msk [vmem:[%s4 + $0x38] sm:$0xff] %vm70, %v158
  %192 = vst.msk [vmem:[%s4 + $0x40] sm:$0xff] %vm70, %v161
  %193 = vst.msk [vmem:[%s4 + $0x48] sm:$0xff] %vm70, %v164
  %194 = vst.msk [vmem:[%s4 + $0x50] sm:$0xff] %vm70, %v167
  %195 = vst.msk [vmem:[%s4 + $0x58] sm:$0xff] %vm70, %v170
  %196 = vst.msk [vmem:[%s4 + $0x60] sm:$0xff] %vm70, %v173
  %197 = vst.msk [vmem:[%s4 + $0x68] sm:$0xff] %vm70, %v176
  %198 = vst.msk [vmem:[%s4 + $0x70] sm:$0xff] %vm70, %v179
  %199 = vst.msk [vmem:[%s4 + $0x78] sm:$0xff] %vm70, %v182
  // Predicated region
  $region18: #{bilevel_routing_attention_nchw.7} parent=0 // pred_check
    _
  $region19: #{bilevel_routing_attention_nchw.7} parent=0 // pred_check_branch
    %201 = sbr.rel (0) target = $region21
  $region20: #{bilevel_routing_attention_nchw.7} parent=0 // pred_region
    _
  $region21: #{bilevel_routing_attention_nchw.7} parent=0 // pred_fallthru
    _
  // Predicated region
  $region22: #{bilevel_routing_attention_nchw.7} parent=0 // pred_check
    _
  $region23: #{bilevel_routing_attention_nchw.7} parent=0 // pred_check_branch
    %203 = sbr.rel (0) target = $region25
  $region24: #{bilevel_routing_attention_nchw.7} parent=0 // pred_region
    _
  $region25: #{bilevel_routing_attention_nchw.7} parent=0 // pred_fallthru
    _

</llo_original>
